<compile_context>
chip_gen: v7x
topology: tpu7x:2x2x1
jax: 0.10.0
libtpu: 0.0.40
codegen_flags: <defaults>
</compile_context>

<pallas_src>
import jax
import jax.numpy as jnp
from jax import lax
from jax.experimental import pallas as pl
from jax.experimental.pallas import tpu as pltpu

_LANES = 128


def _round_up(x, m):
    return (x + m - 1) // m * m


# ----------------------------------------------------------------------------
# Fused Pallas kernel: the entire FPN forward for ONE batch element per grid step.
# ----------------------------------------------------------------------------
def _make_fpn_kernel(plan, out_dtype, compute_dtype):
    """plan: tuple of blocks; block = (conv_plans, apply_relu);
    conv_plan = (kh, sh, h_out)  (static ints).
    Ref order: [x2d, (T_cat, bias_row) per conv ..., out_block_0, out_block_1, ...]
    """
    n_convs = sum(len(b[0]) for b in plan)

    def kernel(*refs):
        x_ref = refs[0]
        wb_refs = refs[1:1 + 2 * n_convs]
        out_refs = refs[1 + 2 * n_convs:]

        cur = x_ref[...]                               # (H, Wpad) f32, one batch elem
        ci = 0
        for b_idx, (conv_plans, apply_relu) in enumerate(plan):
            for c_idx, (kh, sh, h_out) in enumerate(conv_plans):
                t_ref = wb_refs[2 * ci]                # (kh*Wpad_in, Npad) compute_dtype
                b_ref = wb_refs[2 * ci + 1]            # (1, Npad) f32
                # kh shifted row windows concatenated along lanes -> ONE MXU pass
                # (single wide-K dot instead of kh tiny dots + VPU adds).
                # TODO(synk): sh > 1 would make these strided sublane slices
                # (XLU relayout per conv); fold the H-stride into a row-select
                # if strided blocks are ever exercised.
                wins = [cur[i:i + sh * (h_out - 1) + 1:sh, :] for i in range(kh)]
                win = wins[0] if kh == 1 else jnp.concatenate(wins, axis=-1)
                acc = jnp.dot(win.astype(compute_dtype), t_ref[...],
                              preferred_element_type=jnp.float32)
                acc = acc + b_ref[...]                 # bias already f32
                if c_idx == len(conv_plans) - 1 and apply_relu:
                    acc = jnp.maximum(acc, 0.0)
                cur = acc                              # stays in vregs/VMEM
                ci += 1
            out_refs[b_idx][...] = cur.astype(out_dtype)

    return kernel


# ----------------------------------------------------------------------------
# One-time weight preparation (hoisted OUT of the per-call path).
# ----------------------------------------------------------------------------
def _toeplitz_conv_matrix(w_hwio, w_in, sw, in_pad_width, n_pad, dtype):
    """HWIO conv weight (kh, kw, cin, cout) -> (kh*in_pad_width, n_pad) matrix
    implementing the VALID conv along width when left-multiplied by the kh
    lane-concatenated shifted row windows of a (H, in_pad_width) activation
    whose first w_in*cin lanes hold the (w, c) flattened pixels."""
    kh, kw, cin, cout = w_hwio.shape
    w_out = (w_in - kw) // sw + 1
    wp = jnp.arange(w_in)[:, None]                    # input width position
    wo = jnp.arange(w_out)[None, :]                   # output width position
    j = wp - wo * sw                                  # kernel tap index
    valid = (j >= 0) & (j < kw)
    g = w_hwio[:, jnp.clip(j, 0, kw - 1), :, :]       # (kh, w_in, w_out, cin, cout)
    g = jnp.where(valid[None, :, :, None, None], g, 0.0)
    g = jnp.transpose(g, (0, 1, 3, 2, 4))             # (kh, w_in, cin, w_out, cout)
    g = g.reshape(kh, w_in * cin, w_out * cout)
    g = jnp.pad(g, ((0, 0),
                    (0, in_pad_width - w_in * cin),   # pad K rows (zero)
                    (0, n_pad - w_out * cout)))       # pad N cols (zero) -> 128 lanes
    return g.reshape(kh * in_pad_width, n_pad).astype(dtype), w_out


def prepare_fpn(params, in_hw, in_channels, block_st_lst, activation="relu",
                compute_dtype=jnp.bfloat16):
    """Runs once per parameter set (NOT per forward call)."""
    assert activation in ("relu", "none")  # TODO(synk): lrelu/tanh not lowered
    h, w = in_hw
    cin = in_channels
    in_pad = _round_up(w * cin, _LANES)
    x_pad_width = in_pad

    weight_inputs = []
    plan = []
    out_meta = []                                     # per block: (h, w, c, n_pad)
    for block_params, st_lst in zip(params, block_st_lst):
        conv_plans = []
        for (w_hwio, bvec), st in zip(block_params, st_lst):
            kh, kw, _, cout = w_hwio.shape
            sh = sw = int(st)
            h_out = (h - kh) // sh + 1
            w_out = (w - kw) // sw + 1
            n_pad = _round_up(w_out * cout, _LANES)
            t_cat, _ = _toeplitz_conv_matrix(w_hwio, w, sw, in_pad, n_pad,
                                             compute_dtype)
            bias_row = jnp.pad(jnp.tile(bvec, w_out),
                               (0, n_pad - w_out * cout)).reshape(1, n_pad)
            weight_inputs += [t_cat, bias_row.astype(jnp.float32)]
            conv_plans.append((kh, sh, h_out))
            h, w, cin, in_pad = h_out, w_out, cout, n_pad
        plan.append((tuple(conv_plans), activation == "relu"))
        out_meta.append((h, w, cin, in_pad))

    # VMEM-scaling guard (Toeplitz grows O(W^2*Cin*Cout); keep well under v7x 64 MiB).
    total_bytes = sum(int(a.size) * a.dtype.itemsize for a in weight_inputs)
    assert total_bytes < 24 * 1024 * 1024, (
        "Toeplitz stacks too large for VMEM; "
        "TODO(synk): width-tiled band-matmul lowering for large spatial sizes")

    return dict(plan=tuple(plan), out_meta=tuple(out_meta),
                x_pad_width=x_pad_width, in_hw=tuple(in_hw),
                in_channels=in_channels, compute_dtype=compute_dtype,
                weight_inputs=tuple(weight_inputs))


# ----------------------------------------------------------------------------
# Forward: thin per-call wrapper around one pallas_call.
# ----------------------------------------------------------------------------
def make_fpn_forward(prep, out_dtype=jnp.float32):
    plan = prep["plan"]
    out_meta = prep["out_meta"]
    x_pad_width = prep["x_pad_width"]
    compute_dtype = prep["compute_dtype"]
    exp_hw = prep["in_hw"]
    exp_cin = prep["in_channels"]

    def forward(x_nchw, weight_inputs):
        n, cin, h, w = x_nchw.shape
        assert (h, w) == exp_hw and cin == exp_cin
        # NCHW -> (N, H, W*C) channels-last-flattened, zero-padded to 128 lanes.
        x2d = jnp.transpose(x_nchw, (0, 2, 3, 1)).reshape(n, h, w * cin)
        x2d = jnp.pad(x2d, ((0, 0), (0, 0), (0, x_pad_width - w * cin)))

        kernel = _make_fpn_kernel(plan, out_dtype, compute_dtype)
        # Batch dim is squeezed out of the kernel view; weights are index-invariant
        # (DMA'd once, VMEM-resident across grid steps).
        in_specs = [pl.BlockSpec((None, h, x_pad_width), lambda b: (b, 0, 0))]
        in_specs += [pl.BlockSpec(wi.shape, lambda b: (0, 0))
                     for wi in weight_inputs]
        out_specs = tuple(
            pl.BlockSpec((None, hb, npad), lambda b: (b, 0, 0))
            for (hb, wb, cb, npad) in out_meta)
        out_shape = tuple(
            jax.ShapeDtypeStruct((n, hb, npad), out_dtype)
            for (hb, wb, cb, npad) in out_meta)

        outs = pl.pallas_call(
            kernel,
            grid=(n,),
            in_specs=in_specs,
            out_specs=out_specs,
            out_shape=out_shape,
            compiler_params=pltpu.CompilerParams(
                dimension_semantics=("parallel",)),   # v7x: shard batch over 2 TCs
        )(x2d, *weight_inputs)
        if not isinstance(outs, (list, tuple)):
            outs = (outs,)

        # Un-pad lanes and relayout (N, H, Wpad) -> NCHW (pure glue outside kernel).
        feats = []
        for o, (hb, wb, cb, npad) in zip(outs, out_meta):
            o = o[:, :, :wb * cb].reshape(n, hb, wb, cb)
            feats.append(jnp.transpose(o, (0, 3, 1, 2)))
        return feats

    return forward


# ----------------------------------------------------------------------------
# Parameters (PyTorch-Conv2d-style uniform init, HWIO) + pure-JAX reference.
# ----------------------------------------------------------------------------
def init_fpn_params(key, in_channels, out_channels_lst, block_ks_lst):
    params = []
    cin = in_channels
    for out_dims, ks_lst in zip(out_channels_lst, block_ks_lst):
        block = []
        for cout, ks in zip(out_dims, ks_lst):
            key, kw_, kb_ = jax.random.split(key, 3)
            fan_in = cin * ks * ks
            bound = 1.0 / (fan_in ** 0.5)
            w = jax.random.uniform(kw_, (ks, ks, cin, cout), jnp.float32,
                                   minval=-bound, maxval=bound)
            bvec = jax.random.uniform(kb_, (cout,), jnp.float32,
                                      minval=-bound, maxval=bound)
            block.append((w, bvec))
            cin = cout
        params.append(block)
    return params


def fpn_reference(x_nchw, params, block_st_lst):
    x = x_nchw
    feats = []
    for block_params, st_lst in zip(params, block_st_lst):
        n = len(block_params)
        for i, ((w, bvec), st) in enumerate(zip(block_params, st_lst)):
            x = lax.conv_general_dilated(
                x, w, window_strides=(st, st), padding="VALID",
                dimension_numbers=("NCHW", "HWIO", "NCHW"))
            x = x + bvec.reshape(1, -1, 1, 1)
            if i == n - 1:
                x = jnp.maximum(x, 0.0)
        feats.append(x)
    return feats


if __name__ == "__main__":
    key = jax.random.PRNGKey(0)
    k_x, k_p = jax.random.split(key)

    in_channels = 4
    out_channels_lst = [[8, 8], [16, 16]]
    block_ks_lst = [[3, 3], [3, 3]]
    block_st_lst = [[1, 1], [1, 1]]

    x = jax.random.normal(k_x, (2, in_channels, 16, 16), jnp.float32)
    params = init_fpn_params(k_p, in_channels, out_channels_lst, block_ks_lst)
    refs = fpn_reference(x, params, block_st_lst)
    expected_shapes = [(2, 8, 12, 12), (2, 16, 8, 8)]

    # f32 path: tight check of the lowering.  bf16 path (performance default):
    # bf16 MXU operands + f32 accumulation, checked at bf16-appropriate tolerance.
    for compute_dtype, rtol, atol in ((jnp.float32, 1e-4, 1e-4),
                                      (jnp.bfloat16, 5e-2, 5e-2)):
        prep = prepare_fpn(params, (16, 16), in_channels, block_st_lst,
                           activation="relu", compute_dtype=compute_dtype)
        fwd = jax.jit(make_fpn_forward(prep))
        feats = fwd(x, prep["weight_inputs"])
        feats = [jax.block_until_ready(f) for f in feats]
        for f, r, s in zip(feats, refs, expected_shapes):
            assert f.shape == s, (f.shape, s)
            err = float(jnp.max(jnp.abs(f - r)))
            assert jnp.allclose(f, r, rtol=rtol, atol=atol), \
                (str(compute_dtype), err)

    print("KERNEL_OK")
</pallas_src>

<mosaic_0001>
module attributes {stable_mosaic.version = 11 : i64} {
  func.func @kernel(%arg0: i32, %arg1: memref<1x16x128xf32, #tpu.memory_space<vmem>>, %arg2: memref<384x128xf32, #tpu.memory_space<vmem>>, %arg3: memref<1x128xf32, #tpu.memory_space<vmem>>, %arg4: memref<384x128xf32, #tpu.memory_space<vmem>>, %arg5: memref<1x128xf32, #tpu.memory_space<vmem>>, %arg6: memref<384x256xf32, #tpu.memory_space<vmem>>, %arg7: memref<1x256xf32, #tpu.memory_space<vmem>>, %arg8: memref<768x128xf32, #tpu.memory_space<vmem>>, %arg9: memref<1x128xf32, #tpu.memory_space<vmem>>, %arg10: memref<1x12x128xf32, #tpu.memory_space<vmem>>, %arg11: memref<1x8x128xf32, #tpu.memory_space<vmem>>) attributes {dimension_semantics = [#tpu.dimension_semantics<parallel>], iteration_bounds = array<i64: 2>, scalar_prefetch = 0 : i64, scratch_operands = 0 : i64, tpu.core_type = #tpu.core_type<tc>, window_params = [{transform_indices = @transform_0, window_bounds = array<i64: 1, 16, 128>}, {pipeline_mode = #tpu.pipeline_mode<synchronous>, transform_indices = @transform_1, window_bounds = array<i64: 384, 128>}, {pipeline_mode = #tpu.pipeline_mode<synchronous>, transform_indices = @transform_2, window_bounds = array<i64: 1, 128>}, {pipeline_mode = #tpu.pipeline_mode<synchronous>, transform_indices = @transform_3, window_bounds = array<i64: 384, 128>}, {pipeline_mode = #tpu.pipeline_mode<synchronous>, transform_indices = @transform_4, window_bounds = array<i64: 1, 128>}, {pipeline_mode = #tpu.pipeline_mode<synchronous>, transform_indices = @transform_5, window_bounds = array<i64: 384, 256>}, {pipeline_mode = #tpu.pipeline_mode<synchronous>, transform_indices = @transform_6, window_bounds = array<i64: 1, 256>}, {pipeline_mode = #tpu.pipeline_mode<synchronous>, transform_indices = @transform_7, window_bounds = array<i64: 768, 128>}, {pipeline_mode = #tpu.pipeline_mode<synchronous>, transform_indices = @transform_8, window_bounds = array<i64: 1, 128>}, {transform_indices = @transform_9, window_bounds = array<i64: 1, 12, 128>}, {transform_indices = @transform_10, window_bounds = array<i64: 1, 8, 128>}]} {
    %c0 = arith.constant 0 : index
    %c0_0 = arith.constant 0 : index
    %c0_1 = arith.constant 0 : index
    %0 = vector.load %arg1[%c0, %c0_0, %c0_1] : memref<1x16x128xf32, #tpu.memory_space<vmem>>, vector<1x16x128xf32>
    %1 = vector.shape_cast %0 : vector<1x16x128xf32> to vector<16x128xf32>
    %2 = vector.extract_strided_slice %1 {offsets = [0, 0], sizes = [14, 128], strides = [1, 1]} : vector<16x128xf32> to vector<14x128xf32>
    %3 = vector.extract_strided_slice %1 {offsets = [1, 0], sizes = [14, 128], strides = [1, 1]} : vector<16x128xf32> to vector<14x128xf32>
    %4 = vector.extract_strided_slice %1 {offsets = [2, 0], sizes = [14, 128], strides = [1, 1]} : vector<16x128xf32> to vector<14x128xf32>
    %5 = tpu.concatenate %2, %3, %4 in 1 : vector<14x128xf32>, vector<14x128xf32>, vector<14x128xf32> -> vector<14x384xf32>
    %c0_2 = arith.constant 0 : index
    %c0_3 = arith.constant 0 : index
    %6 = vector.load %arg2[%c0_2, %c0_3] : memref<384x128xf32, #tpu.memory_space<vmem>>, vector<384x128xf32>
    %cst = arith.constant dense<0.000000e+00> : vector<14x128xf32>
    %7 = tpu.matmul %5, %6, %cst {dimension_numbers = #tpu.dot_dimension_numbers<[1], [0], [0], [1], [0, 0, 1, 1], [], []>} : vector<14x384xf32>, vector<384x128xf32>, vector<14x128xf32> -> vector<14x128xf32>
    %c0_4 = arith.constant 0 : index
    %c0_5 = arith.constant 0 : index
    %8 = vector.load %arg3[%c0_4, %c0_5] : memref<1x128xf32, #tpu.memory_space<vmem>>, vector<1x128xf32>
    %9 = vector.broadcast %8 : vector<1x128xf32> to vector<14x128xf32>
    %10 = arith.addf %7, %9 : vector<14x128xf32>
    %11 = vector.extract_strided_slice %10 {offsets = [0, 0], sizes = [12, 128], strides = [1, 1]} : vector<14x128xf32> to vector<12x128xf32>
    %12 = vector.extract_strided_slice %10 {offsets = [1, 0], sizes = [12, 128], strides = [1, 1]} : vector<14x128xf32> to vector<12x128xf32>
    %13 = vector.extract_strided_slice %10 {offsets = [2, 0], sizes = [12, 128], strides = [1, 1]} : vector<14x128xf32> to vector<12x128xf32>
    %14 = tpu.concatenate %11, %12, %13 in 1 : vector<12x128xf32>, vector<12x128xf32>, vector<12x128xf32> -> vector<12x384xf32>
    %c0_6 = arith.constant 0 : index
    %c0_7 = arith.constant 0 : index
    %15 = vector.load %arg4[%c0_6, %c0_7] : memref<384x128xf32, #tpu.memory_space<vmem>>, vector<384x128xf32>
    %cst_8 = arith.constant dense<0.000000e+00> : vector<12x128xf32>
    %16 = tpu.matmul %14, %15, %cst_8 {dimension_numbers = #tpu.dot_dimension_numbers<[1], [0], [0], [1], [0, 0, 1, 1], [], []>} : vector<12x384xf32>, vector<384x128xf32>, vector<12x128xf32> -> vector<12x128xf32>
    %c0_9 = arith.constant 0 : index
    %c0_10 = arith.constant 0 : index
    %17 = vector.load %arg5[%c0_9, %c0_10] : memref<1x128xf32, #tpu.memory_space<vmem>>, vector<1x128xf32>
    %18 = vector.broadcast %17 : vector<1x128xf32> to vector<12x128xf32>
    %19 = arith.addf %16, %18 : vector<12x128xf32>
    %cst_11 = arith.constant 0.000000e+00 : f32
    %20 = vector.broadcast %cst_11 : f32 to vector<12x128xf32>
    %21 = arith.maximumf %19, %20 : vector<12x128xf32>
    %c0_12 = arith.constant 0 : index
    %c0_13 = arith.constant 0 : index
    %c0_14 = arith.constant 0 : index
    %22 = vector.load %arg10[%c0_12, %c0_13, %c0_14] : memref<1x12x128xf32, #tpu.memory_space<vmem>>, vector<1x12x128xf32>
    %23 = vector.shape_cast %22 : vector<1x12x128xf32> to vector<12x128xf32>
    %24 = vector.shape_cast %21 : vector<12x128xf32> to vector<1x12x128xf32>
    tpu.vector_store %arg10[%c0_12, %c0_13, %c0_14], %24 {strides = array<i32>} : memref<1x12x128xf32, #tpu.memory_space<vmem>>, vector<1x12x128xf32>,
    %25 = vector.extract_strided_slice %21 {offsets = [0, 0], sizes = [10, 128], strides = [1, 1]} : vector<12x128xf32> to vector<10x128xf32>
    %26 = vector.extract_strided_slice %21 {offsets = [1, 0], sizes = [10, 128], strides = [1, 1]} : vector<12x128xf32> to vector<10x128xf32>
    %27 = vector.extract_strided_slice %21 {offsets = [2, 0], sizes = [10, 128], strides = [1, 1]} : vector<12x128xf32> to vector<10x128xf32>
    %28 = tpu.concatenate %25, %26, %27 in 1 : vector<10x128xf32>, vector<10x128xf32>, vector<10x128xf32> -> vector<10x384xf32>
    %c0_15 = arith.constant 0 : index
    %c0_16 = arith.constant 0 : index
    %29 = vector.load %arg6[%c0_15, %c0_16] : memref<384x256xf32, #tpu.memory_space<vmem>>, vector<384x256xf32>
    %cst_17 = arith.constant dense<0.000000e+00> : vector<10x256xf32>
    %30 = tpu.matmul %28, %29, %cst_17 {dimension_numbers = #tpu.dot_dimension_numbers<[1], [0], [0], [1], [0, 0, 1, 1], [], []>} : vector<10x384xf32>, vector<384x256xf32>, vector<10x256xf32> -> vector<10x256xf32>
    %c0_18 = arith.constant 0 : index
    %c0_19 = arith.constant 0 : index
    %31 = vector.load %arg7[%c0_18, %c0_19] : memref<1x256xf32, #tpu.memory_space<vmem>>, vector<1x256xf32>
    %32 = vector.broadcast %31 : vector<1x256xf32> to vector<10x256xf32>
    %33 = arith.addf %30, %32 : vector<10x256xf32>
    %34 = vector.extract_strided_slice %33 {offsets = [0, 0], sizes = [8, 256], strides = [1, 1]} : vector<10x256xf32> to vector<8x256xf32>
    %35 = vector.extract_strided_slice %33 {offsets = [1, 0], sizes = [8, 256], strides = [1, 1]} : vector<10x256xf32> to vector<8x256xf32>
    %36 = vector.extract_strided_slice %33 {offsets = [2, 0], sizes = [8, 256], strides = [1, 1]} : vector<10x256xf32> to vector<8x256xf32>
    %37 = tpu.concatenate %34, %35, %36 in 1 : vector<8x256xf32>, vector<8x256xf32>, vector<8x256xf32> -> vector<8x768xf32>
    %c0_20 = arith.constant 0 : index
    %c0_21 = arith.constant 0 : index
    %38 = vector.load %arg8[%c0_20, %c0_21] : memref<768x128xf32, #tpu.memory_space<vmem>>, vector<768x128xf32>
    %cst_22 = arith.constant dense<0.000000e+00> : vector<8x128xf32>
    %39 = tpu.matmul %37, %38, %cst_22 {dimension_numbers = #tpu.dot_dimension_numbers<[1], [0], [0], [1], [0, 0, 1, 1], [], []>} : vector<8x768xf32>, vector<768x128xf32>, vector<8x128xf32> -> vector<8x128xf32>
    %c0_23 = arith.constant 0 : index
    %c0_24 = arith.constant 0 : index
    %40 = vector.load %arg9[%c0_23, %c0_24] : memref<1x128xf32, #tpu.memory_space<vmem>>, vector<1x128xf32>
    %41 = vector.broadcast %40 : vector<1x128xf32> to vector<8x128xf32>
    %42 = arith.addf %39, %41 : vector<8x128xf32>
    %cst_25 = arith.constant 0.000000e+00 : f32
    %43 = vector.broadcast %cst_25 : f32 to vector<8x128xf32>
    %44 = arith.maximumf %42, %43 : vector<8x128xf32>
    %c0_26 = arith.constant 0 : index
    %c0_27 = arith.constant 0 : index
    %c0_28 = arith.constant 0 : index
    %45 = vector.load %arg11[%c0_26, %c0_27, %c0_28] : memref<1x8x128xf32, #tpu.memory_space<vmem>>, vector<1x8x128xf32>
    %46 = vector.shape_cast %45 : vector<1x8x128xf32> to vector<8x128xf32>
    %47 = vector.shape_cast %44 : vector<8x128xf32> to vector<1x8x128xf32>
    tpu.vector_store %arg11[%c0_26, %c0_27, %c0_28], %47 {strides = array<i32>} : memref<1x8x128xf32, #tpu.memory_space<vmem>>, vector<1x8x128xf32>,
    return
  }
  func.func @transform_0(%arg0: i32) -> (i32, i32, i32) {
    %c0_i32 = arith.constant 0 : i32
    %c0_i32_0 = arith.constant 0 : i32
    %c0_i32_1 = arith.constant 0 : i32
    return %arg0, %c0_i32, %c0_i32_0 : i32, i32, i32
  }
  func.func @transform_1(%arg0: i32) -> (i32, i32) {
    %c0_i32 = arith.constant 0 : i32
    %c0_i32_0 = arith.constant 0 : i32
    %c0_i32_1 = arith.constant 0 : i32
    return %c0_i32, %c0_i32_0 : i32, i32
  }
  func.func @transform_2(%arg0: i32) -> (i32, i32) {
    %c0_i32 = arith.constant 0 : i32
    %c0_i32_0 = arith.constant 0 : i32
    %c0_i32_1 = arith.constant 0 : i32
    return %c0_i32, %c0_i32_0 : i32, i32
  }
  func.func @transform_3(%arg0: i32) -> (i32, i32) {
    %c0_i32 = arith.constant 0 : i32
    %c0_i32_0 = arith.constant 0 : i32
    %c0_i32_1 = arith.constant 0 : i32
    return %c0_i32, %c0_i32_0 : i32, i32
  }
  func.func @transform_4(%arg0: i32) -> (i32, i32) {
    %c0_i32 = arith.constant 0 : i32
    %c0_i32_0 = arith.constant 0 : i32
    %c0_i32_1 = arith.constant 0 : i32
    return %c0_i32, %c0_i32_0 : i32, i32
  }
  func.func @transform_5(%arg0: i32) -> (i32, i32) {
    %c0_i32 = arith.constant 0 : i32
    %c0_i32_0 = arith.constant 0 : i32
    %c0_i32_1 = arith.constant 0 : i32
    return %c0_i32, %c0_i32_0 : i32, i32
  }
  func.func @transform_6(%arg0: i32) -> (i32, i32) {
    %c0_i32 = arith.constant 0 : i32
    %c0_i32_0 = arith.constant 0 : i32
    %c0_i32_1 = arith.constant 0 : i32
    return %c0_i32, %c0_i32_0 : i32, i32
  }
  func.func @transform_7(%arg0: i32) -> (i32, i32) {
    %c0_i32 = arith.constant 0 : i32
    %c0_i32_0 = arith.constant 0 : i32
    %c0_i32_1 = arith.constant 0 : i32
    return %c0_i32, %c0_i32_0 : i32, i32
  }
  func.func @transform_8(%arg0: i32) -> (i32, i32) {
    %c0_i32 = arith.constant 0 : i32
    %c0_i32_0 = arith.constant 0 : i32
    %c0_i32_1 = arith.constant 0 : i32
    return %c0_i32, %c0_i32_0 : i32, i32
  }
  func.func @transform_9(%arg0: i32) -> (i32, i32, i32) {
    %c0_i32 = arith.constant 0 : i32
    %c0_i32_0 = arith.constant 0 : i32
    %c0_i32_1 = arith.constant 0 : i32
    return %arg0, %c0_i32, %c0_i32_0 : i32, i32, i32
  }
  func.func @transform_10(%arg0: i32) -> (i32, i32, i32) {
    %c0_i32 = arith.constant 0 : i32
    %c0_i32_0 = arith.constant 0 : i32
    %c0_i32_1 = arith.constant 0 : i32
    return %arg0, %c0_i32, %c0_i32_0 : i32, i32, i32
  }
}

</mosaic_0001>

<llo_original>
// kernel: forward.1
$region0: #{forward.1}
  #allocation0 [shape = 'u32[]', space=smem, size = 0x4, offset = 0x4, fixed_abs, tag = 'smem constant byte address 0x4 - core index']
  #allocation1 [shape = 'u32[144,128]{1,0:T(1,128)}', space=vmem, size = 0x12000, scoped, tag = 'internal scratch']
  %s0 = inlined_call_operand.vmem [shape: f32[2,16,128], index: 0, kind: input, shape index: {}]
  %s1 = inlined_call_operand.vmem [shape: f32[384,128], index: 1, kind: input, shape index: {}]
  %s2 = inlined_call_operand.vmem [shape: f32[1,128], index: 2, kind: input, shape index: {}]
  %s3 = inlined_call_operand.hbm [shape: f32[384,128], index: 3, kind: input, shape index: {}]
  %s4 = inlined_call_operand.vmem [shape: f32[1,128], index: 4, kind: input, shape index: {}]
  %s5 = inlined_call_operand.hbm [shape: f32[384,256], index: 5, kind: input, shape index: {}]
  %s6 = inlined_call_operand.vmem [shape: f32[1,256], index: 6, kind: input, shape index: {}]
  %s7 = inlined_call_operand.hbm [shape: f32[768,128], index: 7, kind: input, shape index: {}]
  %s8 = inlined_call_operand.vmem [shape: f32[1,128], index: 8, kind: input, shape index: {}]
  %s9 = inlined_call_operand.vmem [shape: f32[2,12,128], index: 9, kind: output, shape index: {0}]
  %s10 = inlined_call_operand.vmem [shape: f32[2,8,128], index: 10, kind: output, shape index: {1}]
  %11 = xla_tuple %s9, %s10
  %s12 = sld [smem:[#allocation0]]
  $region89: #{forward.1} parent=0
    _
  %s14 = ssub.s32 1, %s12
  %s15 = scalar_select 0, %s14, %s12
  $region1: #{forward.1} parent=0
    #allocation2 [shape = 'u8[196608]{0}', space=vmem, size = 0x30000, scoped, tag = 'input window, operand 3, single buffered']
    #allocation3 [shape = 's32[2]{0}', space=sflag, size = 0x8, scoped, tag = 'scoped memory for forward.1']
    #allocation4 [shape = 'u8[393216]{0}', space=vmem, size = 0x60000, scoped, tag = 'input window, operand 5, single buffered']
    #allocation5 [shape = 's32[1]{0}', space=sflag, size = 0x4, scoped, tag = 'scoped memory for forward.1']
    #allocation6 [shape = 'u8[393216]{0}', space=vmem, size = 0x60000, scoped, tag = 'input window, operand 7, single buffered']
    %16 = vsyncpa [#allocation3], 0
    %17 = vsyncpa [#allocation5], 0
    loop: start=0, step=1, limit=4
    $region2: #{forward.1} parent=1 // loop_pre_header
      _
    $region3: #{forward.1} parent=1 // loop_header
      %s19 = sphi 0, %s23
      %p20 = scmp.ge.s32.totalorder %s19, 4
      %s29 = sphi 0, %s31
      %s32 = sphi 0, %s29
      %s33 = sphi 0, %s32
      %s49 = sphi 0, %s33
      %s53 = sphi 0, %s53
      %s55 = sphi 0, %s53
      %s56 = sphi 0, %s55
      %s70 = sphi 0, %s56
      %s74 = sphi 0, %s74
      %s76 = sphi 0, %s74
      %s77 = sphi 0, %s76
      %s91 = sphi 0, %s77
      %s95 = sphi 0, %s95
      %s97 = sphi 0, %s95
      %s98 = sphi 0, %s97
      %s112 = sphi 0, %s98
      %s116 = sphi 0, %s116
      %s118 = sphi 0, %s116
      %s119 = sphi 0, %s118
      %s133 = sphi 0, %s119
      %s137 = sphi 0, %s137
      %s139 = sphi 0, %s137
      %s140 = sphi 0, %s139
      %s154 = sphi 0, %s140
      %s158 = sphi 0, %s158
      %s160 = sphi 0, %s158
      %s161 = sphi 0, %s160
      %s175 = sphi 0, %s161
      %s179 = sphi 0, %s179
      %s181 = sphi 0, %s179
      %s182 = sphi 0, %s181
      %s196 = sphi 0, %s182
      %s200 = sphi 0, %s200
      %s202 = sphi 0, %s200
      %s203 = sphi 0, %s202
      %s217 = sphi 0, %s203
      %s223 = sphi 0, %s225
      %s226 = sphi 0, %s223
      %s227 = sphi 0, %s226
      %s243 = sphi 0, %s227
      %s249 = sphi 0, %s251
      %s252 = sphi 0, %s249
      %s253 = sphi 0, %s252
      %s269 = sphi 0, %s253
    $region4: #{forward.1} parent=1 // loop_header_branch
      %22 = sbr.rel (%p20) target = $region8
    $region5: #{forward.1} parent=1 // loop_body
      %s24 = ssub.s32 %s19, 1
      %s25 = ssub.s32 %s19, 2
      %s26 = sadd.s32 %s19, 1
      %s27 = ssub.s32 %s19, %s26
      %p28 = scmp.eq.s32.totalorder %s27, 0
      %s30 = sadd.s32 %s29, 1
      %s31 = scalar_select %p28, %s29, %s30
      %p34 = pneg %p28
      %p35 = scmp.eq.s32.totalorder %s19, 1
      %p36 = por %p34, %p35
      %p37 = scmp.ne.s32.totalorder %s29, %s32
      %p38 = scmp.eq.s32.totalorder %s19, 0
      %p39 = por %p37, %p38
      %p40 = scmp.ne.s32.totalorder %s29, %s32
      %p41 = scmp.eq.s32.totalorder %s24, 1
      %p42 = por %p40, %p41
      %p43 = scmp.ne.s32.totalorder %s32, %s33
      %p44 = scmp.eq.s32.totalorder %s24, 0
      %p45 = por %p43, %p44
      %p46 = scmp.ne.s32.totalorder %s32, %s33
      %p47 = scmp.eq.s32.totalorder %s25, 1
      %p48 = por %p46, %p47
      %p50 = scmp.ne.s32.totalorder %s33, %s49
      %p51 = scmp.eq.s32.totalorder %s25, 0
      %p52 = por %p50, %p51
      %s54 = sadd.s32 %s53, 1
      %p57 = scmp.eq.s32.totalorder %s19, 1
      %p58 = scmp.ne.s32.totalorder %s53, %s55
      %p59 = scmp.eq.s32.totalorder %s19, 0
      %p60 = por %p58, %p59
      %p61 = scmp.ne.s32.totalorder %s53, %s55
      %p62 = scmp.eq.s32.totalorder %s24, 1
      %p63 = por %p61, %p62
      %p64 = scmp.ne.s32.totalorder %s55, %s56
      %p65 = scmp.eq.s32.totalorder %s24, 0
      %p66 = por %p64, %p65
      %p67 = scmp.ne.s32.totalorder %s55, %s56
      %p68 = scmp.eq.s32.totalorder %s25, 1
      %p69 = por %p67, %p68
      %p71 = scmp.ne.s32.totalorder %s56, %s70
      %p72 = scmp.eq.s32.totalorder %s25, 0
      %p73 = por %p71, %p72
      %s75 = sadd.s32 %s74, 1
      %p78 = scmp.eq.s32.totalorder %s19, 1
      %p79 = scmp.ne.s32.totalorder %s74, %s76
      %p80 = scmp.eq.s32.totalorder %s19, 0
      %p81 = por %p79, %p80
      %p82 = scmp.ne.s32.totalorder %s74, %s76
      %p83 = scmp.eq.s32.totalorder %s24, 1
      %p84 = por %p82, %p83
      %p85 = scmp.ne.s32.totalorder %s76, %s77
      %p86 = scmp.eq.s32.totalorder %s24, 0
      %p87 = por %p85, %p86
      %p88 = scmp.ne.s32.totalorder %s76, %s77
      %p89 = scmp.eq.s32.totalorder %s25, 1
      %p90 = por %p88, %p89
      %p92 = scmp.ne.s32.totalorder %s77, %s91
      %p93 = scmp.eq.s32.totalorder %s25, 0
      %p94 = por %p92, %p93
      %s96 = sadd.s32 %s95, 1
      %p99 = scmp.eq.s32.totalorder %s19, 1
      %p100 = scmp.ne.s32.totalorder %s95, %s97
      %p101 = scmp.eq.s32.totalorder %s19, 0
      %p102 = por %p100, %p101
      %p103 = scmp.ne.s32.totalorder %s95, %s97
      %p104 = scmp.eq.s32.totalorder %s24, 1
      %p105 = por %p103, %p104
      %p106 = scmp.ne.s32.totalorder %s97, %s98
      %p107 = scmp.eq.s32.totalorder %s24, 0
      %p108 = por %p106, %p107
      %p109 = scmp.ne.s32.totalorder %s97, %s98
      %p110 = scmp.eq.s32.totalorder %s25, 1
      %p111 = por %p109, %p110
      %p113 = scmp.ne.s32.totalorder %s98, %s112
      %p114 = scmp.eq.s32.totalorder %s25, 0
      %p115 = por %p113, %p114
      %s117 = sadd.s32 %s116, 1
      %p120 = scmp.eq.s32.totalorder %s19, 1
      %p121 = scmp.ne.s32.totalorder %s116, %s118
      %p122 = scmp.eq.s32.totalorder %s19, 0
      %p123 = por %p121, %p122
      %p124 = scmp.ne.s32.totalorder %s116, %s118
      %p125 = scmp.eq.s32.totalorder %s24, 1
      %p126 = por %p124, %p125
      %p127 = scmp.ne.s32.totalorder %s118, %s119
      %p128 = scmp.eq.s32.totalorder %s24, 0
      %p129 = por %p127, %p128
      %p130 = scmp.ne.s32.totalorder %s118, %s119
      %p131 = scmp.eq.s32.totalorder %s25, 1
      %p132 = por %p130, %p131
      %p134 = scmp.ne.s32.totalorder %s119, %s133
      %p135 = scmp.eq.s32.totalorder %s25, 0
      %p136 = por %p134, %p135
      %s138 = sadd.s32 %s137, 1
      %p141 = scmp.eq.s32.totalorder %s19, 1
      %p142 = scmp.ne.s32.totalorder %s137, %s139
      %p143 = scmp.eq.s32.totalorder %s19, 0
      %p144 = por %p142, %p143
      %p145 = scmp.ne.s32.totalorder %s137, %s139
      %p146 = scmp.eq.s32.totalorder %s24, 1
      %p147 = por %p145, %p146
      %p148 = scmp.ne.s32.totalorder %s139, %s140
      %p149 = scmp.eq.s32.totalorder %s24, 0
      %p150 = por %p148, %p149
      %p151 = scmp.ne.s32.totalorder %s139, %s140
      %p152 = scmp.eq.s32.totalorder %s25, 1
      %p153 = por %p151, %p152
      %p155 = scmp.ne.s32.totalorder %s140, %s154
      %p156 = scmp.eq.s32.totalorder %s25, 0
      %p157 = por %p155, %p156
      %s159 = sadd.s32 %s158, 1
      %p162 = scmp.eq.s32.totalorder %s19, 1
      %p163 = scmp.ne.s32.totalorder %s158, %s160
      %p164 = scmp.eq.s32.totalorder %s19, 0
      %p165 = por %p163, %p164
      %p166 = scmp.ne.s32.totalorder %s158, %s160
      %p167 = scmp.eq.s32.totalorder %s24, 1
      %p168 = por %p166, %p167
      %p169 = scmp.ne.s32.totalorder %s160, %s161
      %p170 = scmp.eq.s32.totalorder %s24, 0
      %p171 = por %p169, %p170
      %p172 = scmp.ne.s32.totalorder %s160, %s161
      %p173 = scmp.eq.s32.totalorder %s25, 1
      %p174 = por %p172, %p173
      %p176 = scmp.ne.s32.totalorder %s161, %s175
      %p177 = scmp.eq.s32.totalorder %s25, 0
      %p178 = por %p176, %p177
      %s180 = sadd.s32 %s179, 1
      %p183 = scmp.eq.s32.totalorder %s19, 1
      %p184 = scmp.ne.s32.totalorder %s179, %s181
      %p185 = scmp.eq.s32.totalorder %s19, 0
      %p186 = por %p184, %p185
      %p187 = scmp.ne.s32.totalorder %s179, %s181
      %p188 = scmp.eq.s32.totalorder %s24, 1
      %p189 = por %p187, %p188
      %p190 = scmp.ne.s32.totalorder %s181, %s182
      %p191 = scmp.eq.s32.totalorder %s24, 0
      %p192 = por %p190, %p191
      %p193 = scmp.ne.s32.totalorder %s181, %s182
      %p194 = scmp.eq.s32.totalorder %s25, 1
      %p195 = por %p193, %p194
      %p197 = scmp.ne.s32.totalorder %s182, %s196
      %p198 = scmp.eq.s32.totalorder %s25, 0
      %p199 = por %p197, %p198
      %s201 = sadd.s32 %s200, 1
      %p204 = scmp.eq.s32.totalorder %s19, 1
      %p205 = scmp.ne.s32.totalorder %s200, %s202
      %p206 = scmp.eq.s32.totalorder %s19, 0
      %p207 = por %p205, %p206
      %p208 = scmp.ne.s32.totalorder %s200, %s202
      %p209 = scmp.eq.s32.totalorder %s24, 1
      %p210 = por %p208, %p209
      %p211 = scmp.ne.s32.totalorder %s202, %s203
      %p212 = scmp.eq.s32.totalorder %s24, 0
      %p213 = por %p211, %p212
      %p214 = scmp.ne.s32.totalorder %s202, %s203
      %p215 = scmp.eq.s32.totalorder %s25, 1
      %p216 = por %p214, %p215
      %p218 = scmp.ne.s32.totalorder %s203, %s217
      %p219 = scmp.eq.s32.totalorder %s25, 0
      %p220 = por %p218, %p219
      %s221 = ssub.s32 %s19, %s26
      %p222 = scmp.eq.s32.totalorder %s221, 0
      %s224 = sadd.s32 %s223, 1
      %s225 = scalar_select %p222, %s223, %s224
      %p228 = pneg %p222
      %p229 = scmp.eq.s32.totalorder %s19, 1
      %p230 = por %p228, %p229
      %p231 = scmp.ne.s32.totalorder %s223, %s226
      %p232 = scmp.eq.s32.totalorder %s19, 0
      %p233 = por %p231, %p232
      %p234 = scmp.ne.s32.totalorder %s223, %s226
      %p235 = scmp.eq.s32.totalorder %s24, 1
      %p236 = por %p234, %p235
      %p237 = scmp.ne.s32.totalorder %s226, %s227
      %p238 = scmp.eq.s32.totalorder %s24, 0
      %p239 = por %p237, %p238
      %p240 = scmp.ne.s32.totalorder %s226, %s227
      %p241 = scmp.eq.s32.totalorder %s25, 1
      %p242 = por %p240, %p241
      %p244 = scmp.ne.s32.totalorder %s227, %s243
      %p245 = scmp.eq.s32.totalorder %s25, 0
      %p246 = por %p244, %p245
      %s247 = ssub.s32 %s19, %s26
      %p248 = scmp.eq.s32.totalorder %s247, 0
      %s250 = sadd.s32 %s249, 1
      %s251 = scalar_select %p248, %s249, %s250
      %p254 = pneg %p248
      %p255 = scmp.eq.s32.totalorder %s19, 1
      %p256 = por %p254, %p255
      %p257 = scmp.ne.s32.totalorder %s249, %s252
      %p258 = scmp.eq.s32.totalorder %s19, 0
      %p259 = por %p257, %p258
      %p260 = scmp.ne.s32.totalorder %s249, %s252
      %p261 = scmp.eq.s32.totalorder %s24, 1
      %p262 = por %p260, %p261
      %p263 = scmp.ne.s32.totalorder %s252, %s253
      %p264 = scmp.eq.s32.totalorder %s24, 0
      %p265 = por %p263, %p264
      %p266 = scmp.ne.s32.totalorder %s252, %s253
      %p267 = scmp.eq.s32.totalorder %s25, 1
      %p268 = por %p266, %p267
      %p270 = scmp.ne.s32.totalorder %s253, %s269
      %p271 = scmp.eq.s32.totalorder %s25, 0
      %p272 = por %p270, %p271
      %p273 = scmp.le.s32.totalorder 1, %s19
      %p274 = scmp.lt.s32.totalorder %s19, 3
      %p275 = pnand %p273, %p274
      %p276 = pneg %p275
      // Predicated region
      $region9: #{forward.1} parent=5 // pred_check
        _
      $region10: #{forward.1} parent=5 // pred_check_branch
        %278 = sbr.rel (%p275) target = $region12
      $region11: #{forward.1} parent=5 // pred_region
        %s279 = ssub.s32 %s19, 1
        // Predicated region
        $region13: #{forward.1} parent=11 // pred_check
          %p280 = pneg %p66
        $region14: #{forward.1} parent=11 // pred_check_branch
          %282 = sbr.rel (%p280) target = $region16
        $region15: #{forward.1} parent=11 // pred_region
          _
        $region16: #{forward.1} parent=11 // pred_fallthru
          _
        // Predicated region
        $region17: #{forward.1} parent=11 // pred_check
          %p283 = pneg %p87
        $region18: #{forward.1} parent=11 // pred_check_branch
          %285 = sbr.rel (%p283) target = $region20
        $region19: #{forward.1} parent=11 // pred_region
          _
        $region20: #{forward.1} parent=11 // pred_fallthru
          _
        // Predicated region
        $region21: #{forward.1} parent=11 // pred_check
          %p286 = pneg %p108
        $region22: #{forward.1} parent=11 // pred_check_branch
          %288 = sbr.rel (%p286) target = $region24
        $region23: #{forward.1} parent=11 // pred_region
          %s290 = ssub.s32 6144, 6144
          %291 = vsyncadd [#allocation3], %s290
          %s292 = sshll.u32 [#allocation2], 4
          %s293 = int_to_ptr.vmem [resolvable:$true] %s292
          %298 = dma.hbm_to_vmem [thread:$0]  %s3, 6144, %s293, [#allocation3], 128, 128, 8
        $region24: #{forward.1} parent=11 // pred_fallthru
          _
        // Predicated region
        $region25: #{forward.1} parent=11 // pred_check
          %p299 = pneg %p129
        $region26: #{forward.1} parent=11 // pred_check_branch
          %301 = sbr.rel (%p299) target = $region28
        $region27: #{forward.1} parent=11 // pred_region
          _
        $region28: #{forward.1} parent=11 // pred_fallthru
          _
        // Predicated region
        $region29: #{forward.1} parent=11 // pred_check
          %p302 = pneg %p150
        $region30: #{forward.1} parent=11 // pred_check_branch
          %304 = sbr.rel (%p302) target = $region32
        $region31: #{forward.1} parent=11 // pred_region
          %s306 = ssub.s32 12288, 12288
          %307 = vsyncadd [#allocation5], %s306
          %s308 = sshll.u32 [#allocation4], 4
          %s309 = int_to_ptr.vmem [resolvable:$true] %s308
          %314 = dma.hbm_to_vmem [thread:$0]  %s5, 12288, %s309, [#allocation5], 256, 256, 16
        $region32: #{forward.1} parent=11 // pred_fallthru
          _
        // Predicated region
        $region33: #{forward.1} parent=11 // pred_check
          %p315 = pneg %p171
        $region34: #{forward.1} parent=11 // pred_check_branch
          %317 = sbr.rel (%p315) target = $region36
        $region35: #{forward.1} parent=11 // pred_region
          _
        $region36: #{forward.1} parent=11 // pred_fallthru
          _
        // Predicated region
        $region37: #{forward.1} parent=11 // pred_check
          %p318 = pneg %p192
        $region38: #{forward.1} parent=11 // pred_check_branch
          %320 = sbr.rel (%p318) target = $region40
        $region39: #{forward.1} parent=11 // pred_region
          %s322 = ssub.s32 12288, 12288
          %323 = vsyncadd [#allocation5], %s322
          %s324 = sshll.u32 [#allocation6], 4
          %s325 = int_to_ptr.vmem [resolvable:$true] %s324
          %330 = dma.hbm_to_vmem [thread:$0]  %s7, 12288, %s325, [#allocation5], 128, 128, 8
        $region40: #{forward.1} parent=11 // pred_fallthru
          _
        // Predicated region
        $region41: #{forward.1} parent=11 // pred_check
          %p331 = pneg %p213
        $region42: #{forward.1} parent=11 // pred_check_branch
          %333 = sbr.rel (%p331) target = $region44
        $region43: #{forward.1} parent=11 // pred_region
          _
        $region44: #{forward.1} parent=11 // pred_fallthru
          _
      $region12: #{forward.1} parent=5 // pred_fallthru
        _
      %p334 = scmp.lt.s32.totalorder %s19, 2
      // Predicated region
      $region45: #{forward.1} parent=5 // pred_check
        %p335 = pneg %p334
      $region46: #{forward.1} parent=5 // pred_check_branch
        %337 = sbr.rel (%p335) target = $region48
      $region47: #{forward.1} parent=5 // pred_region
        // Predicated region
        $region49: #{forward.1} parent=47 // pred_check
          %p338 = pneg %p39
        $region50: #{forward.1} parent=47 // pred_check_branch
          %340 = sbr.rel (%p338) target = $region52
        $region51: #{forward.1} parent=47 // pred_region
          %p341 = scmp.lt.s32.totalorder %s19, 1
          %s342 = scalar_select %p341, %s19, 1
          %s343 = smul.addr %s342, 2
          %s344 = smul.addr %s343, 8
          %s345 = scalar_lea.vmem %s0, %s344
        $region52: #{forward.1} parent=47 // pred_fallthru
          _
      $region48: #{forward.1} parent=5 // pred_fallthru
        _
      %p346 = scmp.le.s32.totalorder 1, %s19
      %p347 = scmp.lt.s32.totalorder %s19, 3
      %p348 = pnand %p346, %p347
      %p349 = pneg %p348
      // Predicated region
      $region53: #{forward.1} parent=5 // pred_check
        _
      $region54: #{forward.1} parent=5 // pred_check_branch
        %351 = sbr.rel (%p348) target = $region56
      $region55: #{forward.1} parent=5 // pred_region
        %s352 = ssub.s32 %s19, 1
        // Predicated region
        $region57: #{forward.1} parent=55 // pred_check
          %p353 = pneg %p108
        $region58: #{forward.1} parent=55 // pred_check_branch
          %355 = sbr.rel (%p353) target = $region60
        $region59: #{forward.1} parent=55 // pred_region
          %356 = dma.done [#allocation3], 6144
        $region60: #{forward.1} parent=55 // pred_fallthru
          _
        // Predicated region
        $region61: #{forward.1} parent=55 // pred_check
          %p357 = pneg %p150
        $region62: #{forward.1} parent=55 // pred_check_branch
          %359 = sbr.rel (%p357) target = $region64
        $region63: #{forward.1} parent=55 // pred_region
          %360 = dma.done [#allocation5], 12288
        $region64: #{forward.1} parent=55 // pred_fallthru
          _
        // Predicated region
        $region65: #{forward.1} parent=55 // pred_check
          %p361 = pneg %p192
        $region66: #{forward.1} parent=55 // pred_check_branch
          %363 = sbr.rel (%p361) target = $region68
        $region67: #{forward.1} parent=55 // pred_region
          %364 = dma.done [#allocation5], 12288
        $region68: #{forward.1} parent=55 // pred_fallthru
          _
        %p365 = scmp.lt.s32.totalorder %s24, 1
        %s366 = scalar_select %p365, %s24, 1
        %s367 = smul.addr %s366, 2
        %s368 = smul.addr %s367, 8
        %s369 = scalar_lea.vmem %s0, %s368
        %p370 = pneg %p45
        %p371 = pneg %p42
        %p372 = pneg %p66
        %p373 = pneg %p63
        %p374 = pneg %p87
        %p375 = pneg %p84
        %p376 = pneg %p108
        %p377 = pneg %p105
        %p378 = pneg %p129
        %p379 = pneg %p126
        %p380 = pneg %p150
        %p381 = pneg %p147
        %p382 = pneg %p171
        %p383 = pneg %p168
        %p384 = pneg %p192
        %p385 = pneg %p189
        %p386 = pneg %p213
        %p387 = pneg %p210
        %p388 = pneg %p239
        %p389 = pneg %p236
        %p390 = scmp.lt.s32.totalorder %s24, 1
        %s391 = scalar_select %p390, %s24, 1
        %s392 = smul.addr %s391, 2
        %s393 = smul.addr %s392, 8
        %s394 = scalar_lea.vmem %s9, %s393
        %p395 = pneg %p265
        %p396 = pneg %p262
        %p397 = scmp.lt.s32.totalorder %s24, 1
        %s398 = scalar_select %p397, %s24, 1
        %s399 = smul.addr %s398, 8
        %s400 = scalar_lea.vmem %s10, %s399
        %p401 = scmp.lt.s32.totalorder %s24, 1
        %s402 = scalar_select %p401, %s24, 1
        %s403 = smul.addr %s402, 2
        %s404 = smul.addr %s403, 8
        %s405 = scalar_lea.vmem %s0, %s404
        %p406 = scmp.lt.s32.totalorder %s24, 1
        %s407 = scalar_select %p406, %s24, 1
        %s408 = smul.addr %s407, 2
        %s409 = smul.addr %s408, 8
        %s410 = scalar_lea.vmem %s9, %s409
        %p411 = scmp.lt.s32.totalorder %s24, 1
        %s412 = scalar_select %p411, %s24, 1
        %s413 = smul.addr %s412, 8
        %s414 = scalar_lea.vmem %s10, %s413
        %v415 = vld [vmem:[%s405] sm:$0xff]
        %v416 = vld [vmem:[%s405 + $0x8] sm:$0xff]
        %vm419 = vcmask 1046528
        %v420 = vrot.slane %v415, 1
        %v421 = vrot.slane %v416, 1
        %v422 = vsel %vm419, %v420, %v421
        %vm425 = vcmask 1045504
        %v426 = vrot.slane %v415, 2
        %v427 = vrot.slane %v416, 2
        %v428 = vsel %vm425, %v426, %v427
        %v431 = vld [vmem:[%s1] sm:$0xff]
        %v432 = vld [vmem:[%s1 + $0x8] sm:$0xff]
        %v433 = vld [vmem:[%s1 + $0x10] sm:$0xff]
        %v434 = vld [vmem:[%s1 + $0x18] sm:$0xff]
        %v435 = vld [vmem:[%s1 + $0x20] sm:$0xff]
        %v436 = vld [vmem:[%s1 + $0x28] sm:$0xff]
        %v437 = vld [vmem:[%s1 + $0x30] sm:$0xff]
        %v438 = vld [vmem:[%s1 + $0x38] sm:$0xff]
        %v439 = vld [vmem:[%s1 + $0x40] sm:$0xff]
        %v440 = vld [vmem:[%s1 + $0x48] sm:$0xff]
        %v441 = vld [vmem:[%s1 + $0x50] sm:$0xff]
        %v442 = vld [vmem:[%s1 + $0x58] sm:$0xff]
        %v443 = vld [vmem:[%s1 + $0x60] sm:$0xff]
        %v444 = vld [vmem:[%s1 + $0x68] sm:$0xff]
        %v445 = vld [vmem:[%s1 + $0x70] sm:$0xff]
        %v446 = vld [vmem:[%s1 + $0x78] sm:$0xff]
        %v447 = vld [vmem:[%s1 + $0x80] sm:$0xff]
        %v448 = vld [vmem:[%s1 + $0x88] sm:$0xff]
        %v449 = vld [vmem:[%s1 + $0x90] sm:$0xff]
        %v450 = vld [vmem:[%s1 + $0x98] sm:$0xff]
        %v451 = vld [vmem:[%s1 + $0xa0] sm:$0xff]
        %v452 = vld [vmem:[%s1 + $0xa8] sm:$0xff]
        %v453 = vld [vmem:[%s1 + $0xb0] sm:$0xff]
        %v454 = vld [vmem:[%s1 + $0xb8] sm:$0xff]
        %v455 = vld [vmem:[%s1 + $0xc0] sm:$0xff]
        %v456 = vld [vmem:[%s1 + $0xc8] sm:$0xff]
        %v457 = vld [vmem:[%s1 + $0xd0] sm:$0xff]
        %v458 = vld [vmem:[%s1 + $0xd8] sm:$0xff]
        %v459 = vld [vmem:[%s1 + $0xe0] sm:$0xff]
        %v460 = vld [vmem:[%s1 + $0xe8] sm:$0xff]
        %v461 = vld [vmem:[%s1 + $0xf0] sm:$0xff]
        %v462 = vld [vmem:[%s1 + $0xf8] sm:$0xff]
        %v463 = vld [vmem:[%s1 + $0x100] sm:$0xff]
        %v464 = vld [vmem:[%s1 + $0x108] sm:$0xff]
        %v465 = vld [vmem:[%s1 + $0x110] sm:$0xff]
        %v466 = vld [vmem:[%s1 + $0x118] sm:$0xff]
        %v467 = vld [vmem:[%s1 + $0x120] sm:$0xff]
        %v468 = vld [vmem:[%s1 + $0x128] sm:$0xff]
        %v469 = vld [vmem:[%s1 + $0x130] sm:$0xff]
        %v470 = vld [vmem:[%s1 + $0x138] sm:$0xff]
        %v471 = vld [vmem:[%s1 + $0x140] sm:$0xff]
        %v472 = vld [vmem:[%s1 + $0x148] sm:$0xff]
        %v473 = vld [vmem:[%s1 + $0x150] sm:$0xff]
        %v474 = vld [vmem:[%s1 + $0x158] sm:$0xff]
        %v475 = vld [vmem:[%s1 + $0x160] sm:$0xff]
        %v476 = vld [vmem:[%s1 + $0x168] sm:$0xff]
        %v477 = vld [vmem:[%s1 + $0x170] sm:$0xff]
        %v478 = vld [vmem:[%s1 + $0x178] sm:$0xff]
        %v479 = vld [vmem:[%s2] sm:$0x1]
        %v481 = vlaneseq
        %v482 = vshrl.u32 %v481, 7
        %v483 = vsub.s32 0, %v482
        %v484 = vrot.slane %v479, %v483
        %486 = vmatprep.subr.mxu0 0.0
        %487 = vmatpush1.msra.mxu0 %v431
        %488 = vmatprep.subr.mxu0 0.0
        %489 = vmatpush1.msra.mxu0 %v432
        %490 = vmatprep.subr.mxu0 0.0
        %491 = vmatpush1.msra.mxu0 %v433
        %492 = vmatprep.subr.mxu0 0.0
        %493 = vmatpush1.msra.mxu0 %v434
        %494 = vmatprep.subr.mxu0 0.0
        %495 = vmatpush1.msra.mxu0 %v435
        %496 = vmatprep.subr.mxu0 0.0
        %497 = vmatpush1.msra.mxu0 %v436
        %498 = vmatprep.subr.mxu0 0.0
        %499 = vmatpush1.msra.mxu0 %v437
        %500 = vmatprep.subr.mxu0 0.0
        %501 = vmatpush1.msra.mxu0 %v438
        %502 = vmatprep.subr.mxu0 0.0
        %503 = vmatpush1.msra.mxu0 %v439
        %504 = vmatprep.subr.mxu0 0.0
        %505 = vmatpush1.msra.mxu0 %v440
        %506 = vmatprep.subr.mxu0 0.0
        %507 = vmatpush1.msra.mxu0 %v441
        %508 = vmatprep.subr.mxu0 0.0
        %509 = vmatpush1.msra.mxu0 %v442
        %510 = vmatprep.subr.mxu0 0.0
        %511 = vmatpush1.msra.mxu0 %v443
        %512 = vmatprep.subr.mxu0 0.0
        %513 = vmatpush1.msra.mxu0 %v444
        %514 = vmatprep.subr.mxu0 0.0
        %515 = vmatpush1.msra.mxu0 %v445
        %516 = vmatprep.subr.mxu0 0.0
        %517 = vmatpush1.msra.mxu0 %v446
        %518 = vmatprep.subr.mxu0 0.0
        %519 = vmatpush1.msra.mxu0 %v447
        %520 = vmatprep.subr.mxu0 0.0
        %521 = vmatpush1.msra.mxu0 %v448
        %522 = vmatprep.subr.mxu0 0.0
        %523 = vmatpush1.msra.mxu0 %v449
        %524 = vmatprep.subr.mxu0 0.0
        %525 = vmatpush1.msra.mxu0 %v450
        %526 = vmatprep.subr.mxu0 0.0
        %527 = vmatpush1.msra.mxu0 %v451
        %528 = vmatprep.subr.mxu0 0.0
        %529 = vmatpush1.msra.mxu0 %v452
        %530 = vmatprep.subr.mxu0 0.0
        %531 = vmatpush1.msra.mxu0 %v453
        %532 = vmatprep.subr.mxu0 0.0
        %533 = vmatpush1.msra.mxu0 %v454
        %534 = vmatprep.subr.mxu0 0.0
        %535 = vmatpush1.msra.mxu0 %v455
        %536 = vmatprep.subr.mxu0 0.0
        %537 = vmatpush1.msra.mxu0 %v456
        %538 = vmatprep.subr.mxu0 0.0
        %539 = vmatpush1.msra.mxu0 %v457
        %540 = vmatprep.subr.mxu0 0.0
        %541 = vmatpush1.msra.mxu0 %v458
        %542 = vmatprep.subr.mxu0 0.0
        %543 = vmatpush1.msra.mxu0 %v459
        %544 = vmatprep.subr.mxu0 0.0
        %545 = vmatpush1.msra.mxu0 %v460
        %546 = vmatprep.subr.mxu0 0.0
        %547 = vmatpush1.msra.mxu0 %v461
        %548 = vmatprep.subr.mxu0 0.0
        %549 = vmatpush1.msra.mxu0 %v462
        %550 = vmatprep.mubr.f32.mxu0 %v422
        %551 = vmatmul.mubr.f32.gmra.mrb[0].mxu0 %v415
        %v552 = vpop.f32.mrb[0].mxu0
        %v553 = vadd.f32 %v484, %v552
        %v554 = vpop.f32.mrb[0].mxu0
        %555 = vmatprep.mubr.f32.mxu0 %v421
        %556 = vmatmul.mubr.f32.gmra.mrb[0].mxu0 %v416
        %v557 = vpop.f32.mrb[0].mxu0
        %v558 = vadd.f32 %v484, %v557
        %v559 = vpop.f32.mrb[0].mxu0
        %560 = vdwg.mxu0
        %561 = vmatprep.subr.mxu0 0.0
        %562 = vmatpush1.msra.mxu0 %v463
        %563 = vmatprep.subr.mxu0 0.0
        %564 = vmatpush1.msra.mxu0 %v464
        %565 = vmatprep.subr.mxu0 0.0
        %566 = vmatpush1.msra.mxu0 %v465
        %567 = vmatprep.subr.mxu0 0.0
        %568 = vmatpush1.msra.mxu0 %v466
        %569 = vmatprep.subr.mxu0 0.0
        %570 = vmatpush1.msra.mxu0 %v467
        %571 = vmatprep.subr.mxu0 0.0
        %572 = vmatpush1.msra.mxu0 %v468
        %573 = vmatprep.subr.mxu0 0.0
        %574 = vmatpush1.msra.mxu0 %v469
        %575 = vmatprep.subr.mxu0 0.0
        %576 = vmatpush1.msra.mxu0 %v470
        %577 = vmatprep.subr.mxu0 0.0
        %578 = vmatpush1.msra.mxu0 %v471
        %579 = vmatprep.subr.mxu0 0.0
        %580 = vmatpush1.msra.mxu0 %v472
        %581 = vmatprep.subr.mxu0 0.0
        %582 = vmatpush1.msra.mxu0 %v473
        %583 = vmatprep.subr.mxu0 0.0
        %584 = vmatpush1.msra.mxu0 %v474
        %585 = vmatprep.subr.mxu0 0.0
        %586 = vmatpush1.msra.mxu0 %v475
        %587 = vmatprep.subr.mxu0 0.0
        %588 = vmatpush1.msra.mxu0 %v476
        %589 = vmatprep.subr.mxu0 0.0
        %590 = vmatpush1.msra.mxu0 %v477
        %591 = vmatprep.subr.mxu0 0.0
        %592 = vmatpush1.msra.mxu0 %v478
        %593 = vmatprep.subr.mxu0 0.0
        %594 = vmatpush1.msra.mxu0 0.0
        %595 = vmatprep.subr.mxu0 0.0
        %596 = vmatpush1.msra.mxu0 0.0
        %597 = vmatprep.subr.mxu0 0.0
        %598 = vmatpush1.msra.mxu0 0.0
        %599 = vmatprep.subr.mxu0 0.0
        %600 = vmatpush1.msra.mxu0 0.0
        %601 = vmatprep.subr.mxu0 0.0
        %602 = vmatpush1.msra.mxu0 0.0
        %603 = vmatprep.subr.mxu0 0.0
        %604 = vmatpush1.msra.mxu0 0.0
        %605 = vmatprep.subr.mxu0 0.0
        %606 = vmatpush1.msra.mxu0 0.0
        %607 = vmatprep.subr.mxu0 0.0
        %608 = vmatpush1.msra.mxu0 0.0
        %609 = vmatprep.subr.mxu0 0.0
        %610 = vmatpush1.msra.mxu0 0.0
        %611 = vmatprep.subr.mxu0 0.0
        %612 = vmatpush1.msra.mxu0 0.0
        %613 = vmatprep.subr.mxu0 0.0
        %614 = vmatpush1.msra.mxu0 0.0
        %615 = vmatprep.subr.mxu0 0.0
        %616 = vmatpush1.msra.mxu0 0.0
        %617 = vmatprep.subr.mxu0 0.0
        %618 = vmatpush1.msra.mxu0 0.0
        %619 = vmatprep.subr.mxu0 0.0
        %620 = vmatpush1.msra.mxu0 0.0
        %621 = vmatprep.subr.mxu0 0.0
        %622 = vmatpush1.msra.mxu0 0.0
        %623 = vmatprep.subr.mxu0 0.0
        %624 = vmatpush1.msra.mxu0 0.0
        %625 = vmatprep.mubr.f32.mxu0 0.0
        %626 = vmatmul.mubr.f32.gmra.mrb[0].mxu0 %v428
        %v627 = vpop.f32.mrb[0].mxu0
        %v628 = vadd.f32 %v553, %v627
        %v629 = vpop.f32.mrb[0].mxu0
        %630 = vmatprep.mubr.f32.mxu0 0.0
        %631 = vmatmul.mubr.f32.gmra.mrb[0].mxu0 %v427
        %v632 = vpop.f32.mrb[0].mxu0
        %v633 = vadd.f32 %v558, %v632
        %v634 = vpop.f32.mrb[0].mxu0
        %635 = vdwg.mxu0
        %v638 = vrot.slane %v628, 1
        %v639 = vrot.slane %v633, 1
        %v640 = vsel %vm419, %v638, %v639
        %v643 = vrot.slane %v628, 2
        %v644 = vrot.slane %v633, 2
        %v645 = vsel %vm425, %v643, %v644
        %v648 = vld [vmem:[#allocation2] sm:$0xff]
        %v649 = vld [vmem:[#allocation2 + $0x8] sm:$0xff]
        %v650 = vld [vmem:[#allocation2 + $0x10] sm:$0xff]
        %v651 = vld [vmem:[#allocation2 + $0x18] sm:$0xff]
        %v652 = vld [vmem:[#allocation2 + $0x20] sm:$0xff]
        %v653 = vld [vmem:[#allocation2 + $0x28] sm:$0xff]
        %v654 = vld [vmem:[#allocation2 + $0x30] sm:$0xff]
        %v655 = vld [vmem:[#allocation2 + $0x38] sm:$0xff]
        %v656 = vld [vmem:[#allocation2 + $0x40] sm:$0xff]
        %v657 = vld [vmem:[#allocation2 + $0x48] sm:$0xff]
        %v658 = vld [vmem:[#allocation2 + $0x50] sm:$0xff]
        %v659 = vld [vmem:[#allocation2 + $0x58] sm:$0xff]
        %v660 = vld [vmem:[#allocation2 + $0x60] sm:$0xff]
        %v661 = vld [vmem:[#allocation2 + $0x68] sm:$0xff]
        %v662 = vld [vmem:[#allocation2 + $0x70] sm:$0xff]
        %v663 = vld [vmem:[#allocation2 + $0x78] sm:$0xff]
        %v664 = vld [vmem:[#allocation2 + $0x80] sm:$0xff]
        %v665 = vld [vmem:[#allocation2 + $0x88] sm:$0xff]
        %v666 = vld [vmem:[#allocation2 + $0x90] sm:$0xff]
        %v667 = vld [vmem:[#allocation2 + $0x98] sm:$0xff]
        %v668 = vld [vmem:[#allocation2 + $0xa0] sm:$0xff]
        %v669 = vld [vmem:[#allocation2 + $0xa8] sm:$0xff]
        %v670 = vld [vmem:[#allocation2 + $0xb0] sm:$0xff]
        %v671 = vld [vmem:[#allocation2 + $0xb8] sm:$0xff]
        %v672 = vld [vmem:[#allocation2 + $0xc0] sm:$0xff]
        %v673 = vld [vmem:[#allocation2 + $0xc8] sm:$0xff]
        %v674 = vld [vmem:[#allocation2 + $0xd0] sm:$0xff]
        %v675 = vld [vmem:[#allocation2 + $0xd8] sm:$0xff]
        %v676 = vld [vmem:[#allocation2 + $0xe0] sm:$0xff]
        %v677 = vld [vmem:[#allocation2 + $0xe8] sm:$0xff]
        %v678 = vld [vmem:[#allocation2 + $0xf0] sm:$0xff]
        %v679 = vld [vmem:[#allocation2 + $0xf8] sm:$0xff]
        %v680 = vld [vmem:[#allocation2 + $0x100] sm:$0xff]
        %v681 = vld [vmem:[#allocation2 + $0x108] sm:$0xff]
        %v682 = vld [vmem:[#allocation2 + $0x110] sm:$0xff]
        %v683 = vld [vmem:[#allocation2 + $0x118] sm:$0xff]
        %v684 = vld [vmem:[#allocation2 + $0x120] sm:$0xff]
        %v685 = vld [vmem:[#allocation2 + $0x128] sm:$0xff]
        %v686 = vld [vmem:[#allocation2 + $0x130] sm:$0xff]
        %v687 = vld [vmem:[#allocation2 + $0x138] sm:$0xff]
        %v688 = vld [vmem:[#allocation2 + $0x140] sm:$0xff]
        %v689 = vld [vmem:[#allocation2 + $0x148] sm:$0xff]
        %v690 = vld [vmem:[#allocation2 + $0x150] sm:$0xff]
        %v691 = vld [vmem:[#allocation2 + $0x158] sm:$0xff]
        %v692 = vld [vmem:[#allocation2 + $0x160] sm:$0xff]
        %v693 = vld [vmem:[#allocation2 + $0x168] sm:$0xff]
        %v694 = vld [vmem:[#allocation2 + $0x170] sm:$0xff]
        %v695 = vld [vmem:[#allocation2 + $0x178] sm:$0xff]
        %v696 = vld [vmem:[%s4] sm:$0x1]
        %v698 = vlaneseq
        %v699 = vshrl.u32 %v698, 7
        %v700 = vsub.s32 0, %v699
        %v701 = vrot.slane %v696, %v700
        %703 = vmatprep.subr.mxu0 0.0
        %704 = vmatpush1.msra.mxu0 %v648
        %705 = vmatprep.subr.mxu0 0.0
        %706 = vmatpush1.msra.mxu0 %v649
        %707 = vmatprep.subr.mxu0 0.0
        %708 = vmatpush1.msra.mxu0 %v650
        %709 = vmatprep.subr.mxu0 0.0
        %710 = vmatpush1.msra.mxu0 %v651
        %711 = vmatprep.subr.mxu0 0.0
        %712 = vmatpush1.msra.mxu0 %v652
        %713 = vmatprep.subr.mxu0 0.0
        %714 = vmatpush1.msra.mxu0 %v653
        %715 = vmatprep.subr.mxu0 0.0
        %716 = vmatpush1.msra.mxu0 %v654
        %717 = vmatprep.subr.mxu0 0.0
        %718 = vmatpush1.msra.mxu0 %v655
        %719 = vmatprep.subr.mxu0 0.0
        %720 = vmatpush1.msra.mxu0 %v656
        %721 = vmatprep.subr.mxu0 0.0
        %722 = vmatpush1.msra.mxu0 %v657
        %723 = vmatprep.subr.mxu0 0.0
        %724 = vmatpush1.msra.mxu0 %v658
        %725 = vmatprep.subr.mxu0 0.0
        %726 = vmatpush1.msra.mxu0 %v659
        %727 = vmatprep.subr.mxu0 0.0
        %728 = vmatpush1.msra.mxu0 %v660
        %729 = vmatprep.subr.mxu0 0.0
        %730 = vmatpush1.msra.mxu0 %v661
        %731 = vmatprep.subr.mxu0 0.0
        %732 = vmatpush1.msra.mxu0 %v662
        %733 = vmatprep.subr.mxu0 0.0
        %734 = vmatpush1.msra.mxu0 %v663
        %735 = vmatprep.subr.mxu0 0.0
        %736 = vmatpush1.msra.mxu0 %v664
        %737 = vmatprep.subr.mxu0 0.0
        %738 = vmatpush1.msra.mxu0 %v665
        %739 = vmatprep.subr.mxu0 0.0
        %740 = vmatpush1.msra.mxu0 %v666
        %741 = vmatprep.subr.mxu0 0.0
        %742 = vmatpush1.msra.mxu0 %v667
        %743 = vmatprep.subr.mxu0 0.0
        %744 = vmatpush1.msra.mxu0 %v668
        %745 = vmatprep.subr.mxu0 0.0
        %746 = vmatpush1.msra.mxu0 %v669
        %747 = vmatprep.subr.mxu0 0.0
        %748 = vmatpush1.msra.mxu0 %v670
        %749 = vmatprep.subr.mxu0 0.0
        %750 = vmatpush1.msra.mxu0 %v671
        %751 = vmatprep.subr.mxu0 0.0
        %752 = vmatpush1.msra.mxu0 %v672
        %753 = vmatprep.subr.mxu0 0.0
        %754 = vmatpush1.msra.mxu0 %v673
        %755 = vmatprep.subr.mxu0 0.0
        %756 = vmatpush1.msra.mxu0 %v674
        %757 = vmatprep.subr.mxu0 0.0
        %758 = vmatpush1.msra.mxu0 %v675
        %759 = vmatprep.subr.mxu0 0.0
        %760 = vmatpush1.msra.mxu0 %v676
        %761 = vmatprep.subr.mxu0 0.0
        %762 = vmatpush1.msra.mxu0 %v677
        %763 = vmatprep.subr.mxu0 0.0
        %764 = vmatpush1.msra.mxu0 %v678
        %765 = vmatprep.subr.mxu0 0.0
        %766 = vmatpush1.msra.mxu0 %v679
        %767 = vmatprep.mubr.f32.mxu0 %v640
        %768 = vmatmul.mubr.f32.gmra.mrb[0].mxu0 %v628
        %v769 = vpop.f32.mrb[0].mxu0
        %v770 = vadd.f32 %v701, %v769
        %v771 = vpop.f32.mrb[0].mxu0
        %772 = vmatprep.mubr.f32.mxu0 %v639
        %773 = vmatmul.mubr.f32.gmra.mrb[0].mxu0 %v633
        %v774 = vpop.f32.mrb[0].mxu0
        %v775 = vadd.f32 %v701, %v774
        %v776 = vpop.f32.mrb[0].mxu0
        %777 = vdwg.mxu0
        %778 = vmatprep.subr.mxu0 0.0
        %779 = vmatpush1.msra.mxu0 %v680
        %780 = vmatprep.subr.mxu0 0.0
        %781 = vmatpush1.msra.mxu0 %v681
        %782 = vmatprep.subr.mxu0 0.0
        %783 = vmatpush1.msra.mxu0 %v682
        %784 = vmatprep.subr.mxu0 0.0
        %785 = vmatpush1.msra.mxu0 %v683
        %786 = vmatprep.subr.mxu0 0.0
        %787 = vmatpush1.msra.mxu0 %v684
        %788 = vmatprep.subr.mxu0 0.0
        %789 = vmatpush1.msra.mxu0 %v685
        %790 = vmatprep.subr.mxu0 0.0
        %791 = vmatpush1.msra.mxu0 %v686
        %792 = vmatprep.subr.mxu0 0.0
        %793 = vmatpush1.msra.mxu0 %v687
        %794 = vmatprep.subr.mxu0 0.0
        %795 = vmatpush1.msra.mxu0 %v688
        %796 = vmatprep.subr.mxu0 0.0
        %797 = vmatpush1.msra.mxu0 %v689
        %798 = vmatprep.subr.mxu0 0.0
        %799 = vmatpush1.msra.mxu0 %v690
        %800 = vmatprep.subr.mxu0 0.0
        %801 = vmatpush1.msra.mxu0 %v691
        %802 = vmatprep.subr.mxu0 0.0
        %803 = vmatpush1.msra.mxu0 %v692
        %804 = vmatprep.subr.mxu0 0.0
        %805 = vmatpush1.msra.mxu0 %v693
        %806 = vmatprep.subr.mxu0 0.0
        %807 = vmatpush1.msra.mxu0 %v694
        %808 = vmatprep.subr.mxu0 0.0
        %809 = vmatpush1.msra.mxu0 %v695
        %810 = vmatprep.subr.mxu0 0.0
        %811 = vmatpush1.msra.mxu0 0.0
        %812 = vmatprep.subr.mxu0 0.0
        %813 = vmatpush1.msra.mxu0 0.0
        %814 = vmatprep.subr.mxu0 0.0
        %815 = vmatpush1.msra.mxu0 0.0
        %816 = vmatprep.subr.mxu0 0.0
        %817 = vmatpush1.msra.mxu0 0.0
        %818 = vmatprep.subr.mxu0 0.0
        %819 = vmatpush1.msra.mxu0 0.0
        %820 = vmatprep.subr.mxu0 0.0
        %821 = vmatpush1.msra.mxu0 0.0
        %822 = vmatprep.subr.mxu0 0.0
        %823 = vmatpush1.msra.mxu0 0.0
        %824 = vmatprep.subr.mxu0 0.0
        %825 = vmatpush1.msra.mxu0 0.0
        %826 = vmatprep.subr.mxu0 0.0
        %827 = vmatpush1.msra.mxu0 0.0
        %828 = vmatprep.subr.mxu0 0.0
        %829 = vmatpush1.msra.mxu0 0.0
        %830 = vmatprep.subr.mxu0 0.0
        %831 = vmatpush1.msra.mxu0 0.0
        %832 = vmatprep.subr.mxu0 0.0
        %833 = vmatpush1.msra.mxu0 0.0
        %834 = vmatprep.subr.mxu0 0.0
        %835 = vmatpush1.msra.mxu0 0.0
        %836 = vmatprep.subr.mxu0 0.0
        %837 = vmatpush1.msra.mxu0 0.0
        %838 = vmatprep.subr.mxu0 0.0
        %839 = vmatpush1.msra.mxu0 0.0
        %840 = vmatprep.subr.mxu0 0.0
        %841 = vmatpush1.msra.mxu0 0.0
        %842 = vmatprep.mubr.f32.mxu0 0.0
        %843 = vmatmul.mubr.f32.gmra.mrb[0].mxu0 %v645
        %v844 = vpop.f32.mrb[0].mxu0
        %v845 = vadd.f32 %v770, %v844
        %v846 = vpop.f32.mrb[0].mxu0
        %847 = vmatprep.mubr.f32.mxu0 0.0
        %848 = vmatmul.mubr.f32.gmra.mrb[0].mxu0 %v644
        %v849 = vpop.f32.mrb[0].mxu0
        %v850 = vadd.f32 %v775, %v849
        %v851 = vpop.f32.mrb[0].mxu0
        %852 = vdwg.mxu0
        %v853 = vmax.f32 %v845, 0.0
        %v854 = vmax.f32 %v850, 0.0
        %855 = vst [vmem:[%s410] sm:$0xff] %v853
        %856 = vst [vmem:[%s410 + $0x8] sm:$0xf] %v854
        %v859 = vrot.slane %v853, 1
        %v860 = vrot.slane %v854, 1
        %v861 = vsel %vm419, %v859, %v860
        %v864 = vrot.slane %v853, 2
        %v865 = vrot.slane %v854, 2
        %v866 = vsel %vm425, %v864, %v865
        %v869 = vld [vmem:[#allocation4] sm:$0xff]
        %v870 = vld [vmem:[#allocation4 + $0x8] sm:$0xff]
        %v871 = vld [vmem:[#allocation4 + $0x10] sm:$0xff]
        %v872 = vld [vmem:[#allocation4 + $0x18] sm:$0xff]
        %v873 = vld [vmem:[#allocation4 + $0x20] sm:$0xff]
        %v874 = vld [vmem:[#allocation4 + $0x28] sm:$0xff]
        %v875 = vld [vmem:[#allocation4 + $0x30] sm:$0xff]
        %v876 = vld [vmem:[#allocation4 + $0x38] sm:$0xff]
        %v877 = vld [vmem:[#allocation4 + $0x40] sm:$0xff]
        %v878 = vld [vmem:[#allocation4 + $0x48] sm:$0xff]
        %v879 = vld [vmem:[#allocation4 + $0x50] sm:$0xff]
        %v880 = vld [vmem:[#allocation4 + $0x58] sm:$0xff]
        %v881 = vld [vmem:[#allocation4 + $0x60] sm:$0xff]
        %v882 = vld [vmem:[#allocation4 + $0x68] sm:$0xff]
        %v883 = vld [vmem:[#allocation4 + $0x70] sm:$0xff]
        %v884 = vld [vmem:[#allocation4 + $0x78] sm:$0xff]
        %v885 = vld [vmem:[#allocation4 + $0x80] sm:$0xff]
        %v886 = vld [vmem:[#allocation4 + $0x88] sm:$0xff]
        %v887 = vld [vmem:[#allocation4 + $0x90] sm:$0xff]
        %v888 = vld [vmem:[#allocation4 + $0x98] sm:$0xff]
        %v889 = vld [vmem:[#allocation4 + $0xa0] sm:$0xff]
        %v890 = vld [vmem:[#allocation4 + $0xa8] sm:$0xff]
        %v891 = vld [vmem:[#allocation4 + $0xb0] sm:$0xff]
        %v892 = vld [vmem:[#allocation4 + $0xb8] sm:$0xff]
        %v893 = vld [vmem:[#allocation4 + $0xc0] sm:$0xff]
        %v894 = vld [vmem:[#allocation4 + $0xc8] sm:$0xff]
        %v895 = vld [vmem:[#allocation4 + $0xd0] sm:$0xff]
        %v896 = vld [vmem:[#allocation4 + $0xd8] sm:$0xff]
        %v897 = vld [vmem:[#allocation4 + $0xe0] sm:$0xff]
        %v898 = vld [vmem:[#allocation4 + $0xe8] sm:$0xff]
        %v899 = vld [vmem:[#allocation4 + $0xf0] sm:$0xff]
        %v900 = vld [vmem:[#allocation4 + $0xf8] sm:$0xff]
        %v901 = vld [vmem:[#allocation4 + $0x100] sm:$0xff]
        %v902 = vld [vmem:[#allocation4 + $0x108] sm:$0xff]
        %v903 = vld [vmem:[#allocation4 + $0x110] sm:$0xff]
        %v904 = vld [vmem:[#allocation4 + $0x118] sm:$0xff]
        %v905 = vld [vmem:[#allocation4 + $0x120] sm:$0xff]
        %v906 = vld [vmem:[#allocation4 + $0x128] sm:$0xff]
        %v907 = vld [vmem:[#allocation4 + $0x130] sm:$0xff]
        %v908 = vld [vmem:[#allocation4 + $0x138] sm:$0xff]
        %v909 = vld [vmem:[#allocation4 + $0x140] sm:$0xff]
        %v910 = vld [vmem:[#allocation4 + $0x148] sm:$0xff]
        %v911 = vld [vmem:[#allocation4 + $0x150] sm:$0xff]
        %v912 = vld [vmem:[#allocation4 + $0x158] sm:$0xff]
        %v913 = vld [vmem:[#allocation4 + $0x160] sm:$0xff]
        %v914 = vld [vmem:[#allocation4 + $0x168] sm:$0xff]
        %v915 = vld [vmem:[#allocation4 + $0x170] sm:$0xff]
        %v916 = vld [vmem:[#allocation4 + $0x178] sm:$0xff]
        %v917 = vld [vmem:[#allocation4 + $0x180] sm:$0xff]
        %v918 = vld [vmem:[#allocation4 + $0x188] sm:$0xff]
        %v919 = vld [vmem:[#allocation4 + $0x190] sm:$0xff]
        %v920 = vld [vmem:[#allocation4 + $0x198] sm:$0xff]
        %v921 = vld [vmem:[#allocation4 + $0x1a0] sm:$0xff]
        %v922 = vld [vmem:[#allocation4 + $0x1a8] sm:$0xff]
        %v923 = vld [vmem:[#allocation4 + $0x1b0] sm:$0xff]
        %v924 = vld [vmem:[#allocation4 + $0x1b8] sm:$0xff]
        %v925 = vld [vmem:[#allocation4 + $0x1c0] sm:$0xff]
        %v926 = vld [vmem:[#allocation4 + $0x1c8] sm:$0xff]
        %v927 = vld [vmem:[#allocation4 + $0x1d0] sm:$0xff]
        %v928 = vld [vmem:[#allocation4 + $0x1d8] sm:$0xff]
        %v929 = vld [vmem:[#allocation4 + $0x1e0] sm:$0xff]
        %v930 = vld [vmem:[#allocation4 + $0x1e8] sm:$0xff]
        %v931 = vld [vmem:[#allocation4 + $0x1f0] sm:$0xff]
        %v932 = vld [vmem:[#allocation4 + $0x1f8] sm:$0xff]
        %v933 = vld [vmem:[#allocation4 + $0x200] sm:$0xff]
        %v934 = vld [vmem:[#allocation4 + $0x208] sm:$0xff]
        %v935 = vld [vmem:[#allocation4 + $0x210] sm:$0xff]
        %v936 = vld [vmem:[#allocation4 + $0x218] sm:$0xff]
        %v937 = vld [vmem:[#allocation4 + $0x220] sm:$0xff]
        %v938 = vld [vmem:[#allocation4 + $0x228] sm:$0xff]
        %v939 = vld [vmem:[#allocation4 + $0x230] sm:$0xff]
        %v940 = vld [vmem:[#allocation4 + $0x238] sm:$0xff]
        %v941 = vld [vmem:[#allocation4 + $0x240] sm:$0xff]
        %v942 = vld [vmem:[#allocation4 + $0x248] sm:$0xff]
        %v943 = vld [vmem:[#allocation4 + $0x250] sm:$0xff]
        %v944 = vld [vmem:[#allocation4 + $0x258] sm:$0xff]
        %v945 = vld [vmem:[#allocation4 + $0x260] sm:$0xff]
        %v946 = vld [vmem:[#allocation4 + $0x268] sm:$0xff]
        %v947 = vld [vmem:[#allocation4 + $0x270] sm:$0xff]
        %v948 = vld [vmem:[#allocation4 + $0x278] sm:$0xff]
        %v949 = vld [vmem:[#allocation4 + $0x280] sm:$0xff]
        %v950 = vld [vmem:[#allocation4 + $0x288] sm:$0xff]
        %v951 = vld [vmem:[#allocation4 + $0x290] sm:$0xff]
        %v952 = vld [vmem:[#allocation4 + $0x298] sm:$0xff]
        %v953 = vld [vmem:[#allocation4 + $0x2a0] sm:$0xff]
        %v954 = vld [vmem:[#allocation4 + $0x2a8] sm:$0xff]
        %v955 = vld [vmem:[#allocation4 + $0x2b0] sm:$0xff]
        %v956 = vld [vmem:[#allocation4 + $0x2b8] sm:$0xff]
        %v957 = vld [vmem:[#allocation4 + $0x2c0] sm:$0xff]
        %v958 = vld [vmem:[#allocation4 + $0x2c8] sm:$0xff]
        %v959 = vld [vmem:[#allocation4 + $0x2d0] sm:$0xff]
        %v960 = vld [vmem:[#allocation4 + $0x2d8] sm:$0xff]
        %v961 = vld [vmem:[#allocation4 + $0x2e0] sm:$0xff]
        %v962 = vld [vmem:[#allocation4 + $0x2e8] sm:$0xff]
        %v963 = vld [vmem:[#allocation4 + $0x2f0] sm:$0xff]
        %v964 = vld [vmem:[#allocation4 + $0x2f8] sm:$0xff]
        %v965 = vld [vmem:[%s6] sm:$0x3]
        %v967 = vlaneseq
        %v968 = vshrl.u32 %v967, 7
        %v969 = vsub.s32 0, %v968
        %v970 = vrot.slane %v965, %v969
        %v971 = vlaneseq
        %v972 = vshrl.u32 %v971, 7
        %v973 = vsub.s32 1, %v972
        %v974 = vrot.slane %v965, %v973
        %977 = vmatprep.subr.mxu0 %v870
        %978 = vmatpush1.msra.mxu0 %v869
        %979 = vmatprep.subr.mxu0 %v872
        %980 = vmatpush1.msra.mxu0 %v871
        %981 = vmatprep.subr.mxu0 %v874
        %982 = vmatpush1.msra.mxu0 %v873
        %983 = vmatprep.subr.mxu0 %v876
        %984 = vmatpush1.msra.mxu0 %v875
        %985 = vmatprep.subr.mxu0 %v878
        %986 = vmatpush1.msra.mxu0 %v877
        %987 = vmatprep.subr.mxu0 %v880
        %988 = vmatpush1.msra.mxu0 %v879
        %989 = vmatprep.subr.mxu0 %v882
        %990 = vmatpush1.msra.mxu0 %v881
        %991 = vmatprep.subr.mxu0 %v884
        %992 = vmatpush1.msra.mxu0 %v883
        %993 = vmatprep.subr.mxu0 %v886
        %994 = vmatpush1.msra.mxu0 %v885
        %995 = vmatprep.subr.mxu0 %v888
        %996 = vmatpush1.msra.mxu0 %v887
        %997 = vmatprep.subr.mxu0 %v890
        %998 = vmatpush1.msra.mxu0 %v889
        %999 = vmatprep.subr.mxu0 %v892
        %1000 = vmatpush1.msra.mxu0 %v891
        %1001 = vmatprep.subr.mxu0 %v894
        %1002 = vmatpush1.msra.mxu0 %v893
        %1003 = vmatprep.subr.mxu0 %v896
        %1004 = vmatpush1.msra.mxu0 %v895
        %1005 = vmatprep.subr.mxu0 %v898
        %1006 = vmatpush1.msra.mxu0 %v897
        %1007 = vmatprep.subr.mxu0 %v900
        %1008 = vmatpush1.msra.mxu0 %v899
        %1009 = vmatprep.subr.mxu0 %v902
        %1010 = vmatpush1.msra.mxu0 %v901
        %1011 = vmatprep.subr.mxu0 %v904
        %1012 = vmatpush1.msra.mxu0 %v903
        %1013 = vmatprep.subr.mxu0 %v906
        %1014 = vmatpush1.msra.mxu0 %v905
        %1015 = vmatprep.subr.mxu0 %v908
        %1016 = vmatpush1.msra.mxu0 %v907
        %1017 = vmatprep.subr.mxu0 %v910
        %1018 = vmatpush1.msra.mxu0 %v909
        %1019 = vmatprep.subr.mxu0 %v912
        %1020 = vmatpush1.msra.mxu0 %v911
        %1021 = vmatprep.subr.mxu0 %v914
        %1022 = vmatpush1.msra.mxu0 %v913
        %1023 = vmatprep.subr.mxu0 %v916
        %1024 = vmatpush1.msra.mxu0 %v915
        %1025 = vmatprep.subr.mxu0 %v918
        %1026 = vmatpush1.msra.mxu0 %v917
        %1027 = vmatprep.subr.mxu0 %v920
        %1028 = vmatpush1.msra.mxu0 %v919
        %1029 = vmatprep.subr.mxu0 %v922
        %1030 = vmatpush1.msra.mxu0 %v921
        %1031 = vmatprep.subr.mxu0 %v924
        %1032 = vmatpush1.msra.mxu0 %v923
        %1033 = vmatprep.subr.mxu0 %v926
        %1034 = vmatpush1.msra.mxu0 %v925
        %1035 = vmatprep.subr.mxu0 %v928
        %1036 = vmatpush1.msra.mxu0 %v927
        %1037 = vmatprep.subr.mxu0 %v930
        %1038 = vmatpush1.msra.mxu0 %v929
        %1039 = vmatprep.subr.mxu0 %v932
        %1040 = vmatpush1.msra.mxu0 %v931
        %1041 = vmatprep.mubr.f32.mxu0 %v861
        %1042 = vmatmul.mubr.f32.gmra.mrb[0].mxu0 %v853
        %v1043 = vpop.f32.mrb[0].mxu0
        %v1044 = vadd.f32 %v970, %v1043
        %v1045 = vpop.f32.mrb[0].mxu0
        %v1046 = vadd.f32 %v974, %v1045
        %1047 = vmatprep.mubr.f32.mxu0 %v860
        %1048 = vmatmul.mubr.f32.gmra.mrb[0].mxu0 %v854
        %v1049 = vpop.f32.mrb[0].mxu0
        %v1050 = vadd.f32 %v970, %v1049
        %v1051 = vpop.f32.mrb[0].mxu0
        %v1052 = vadd.f32 %v974, %v1051
        %1053 = vdwg.mxu0
        %1054 = vmatprep.subr.mxu0 %v934
        %1055 = vmatpush1.msra.mxu0 %v933
        %1056 = vmatprep.subr.mxu0 %v936
        %1057 = vmatpush1.msra.mxu0 %v935
        %1058 = vmatprep.subr.mxu0 %v938
        %1059 = vmatpush1.msra.mxu0 %v937
        %1060 = vmatprep.subr.mxu0 %v940
        %1061 = vmatpush1.msra.mxu0 %v939
        %1062 = vmatprep.subr.mxu0 %v942
        %1063 = vmatpush1.msra.mxu0 %v941
        %1064 = vmatprep.subr.mxu0 %v944
        %1065 = vmatpush1.msra.mxu0 %v943
        %1066 = vmatprep.subr.mxu0 %v946
        %1067 = vmatpush1.msra.mxu0 %v945
        %1068 = vmatprep.subr.mxu0 %v948
        %1069 = vmatpush1.msra.mxu0 %v947
        %1070 = vmatprep.subr.mxu0 %v950
        %1071 = vmatpush1.msra.mxu0 %v949
        %1072 = vmatprep.subr.mxu0 %v952
        %1073 = vmatpush1.msra.mxu0 %v951
        %1074 = vmatprep.subr.mxu0 %v954
        %1075 = vmatpush1.msra.mxu0 %v953
        %1076 = vmatprep.subr.mxu0 %v956
        %1077 = vmatpush1.msra.mxu0 %v955
        %1078 = vmatprep.subr.mxu0 %v958
        %1079 = vmatpush1.msra.mxu0 %v957
        %1080 = vmatprep.subr.mxu0 %v960
        %1081 = vmatpush1.msra.mxu0 %v959
        %1082 = vmatprep.subr.mxu0 %v962
        %1083 = vmatpush1.msra.mxu0 %v961
        %1084 = vmatprep.subr.mxu0 %v964
        %1085 = vmatpush1.msra.mxu0 %v963
        %1086 = vmatprep.subr.mxu0 0.0
        %1087 = vmatpush1.msra.mxu0 0.0
        %1088 = vmatprep.subr.mxu0 0.0
        %1089 = vmatpush1.msra.mxu0 0.0
        %1090 = vmatprep.subr.mxu0 0.0
        %1091 = vmatpush1.msra.mxu0 0.0
        %1092 = vmatprep.subr.mxu0 0.0
        %1093 = vmatpush1.msra.mxu0 0.0
        %1094 = vmatprep.subr.mxu0 0.0
        %1095 = vmatpush1.msra.mxu0 0.0
        %1096 = vmatprep.subr.mxu0 0.0
        %1097 = vmatpush1.msra.mxu0 0.0
        %1098 = vmatprep.subr.mxu0 0.0
        %1099 = vmatpush1.msra.mxu0 0.0
        %1100 = vmatprep.subr.mxu0 0.0
        %1101 = vmatpush1.msra.mxu0 0.0
        %1102 = vmatprep.subr.mxu0 0.0
        %1103 = vmatpush1.msra.mxu0 0.0
        %1104 = vmatprep.subr.mxu0 0.0
        %1105 = vmatpush1.msra.mxu0 0.0
        %1106 = vmatprep.subr.mxu0 0.0
        %1107 = vmatpush1.msra.mxu0 0.0
        %1108 = vmatprep.subr.mxu0 0.0
        %1109 = vmatpush1.msra.mxu0 0.0
        %1110 = vmatprep.subr.mxu0 0.0
        %1111 = vmatpush1.msra.mxu0 0.0
        %1112 = vmatprep.subr.mxu0 0.0
        %1113 = vmatpush1.msra.mxu0 0.0
        %1114 = vmatprep.subr.mxu0 0.0
        %1115 = vmatpush1.msra.mxu0 0.0
        %1116 = vmatprep.subr.mxu0 0.0
        %1117 = vmatpush1.msra.mxu0 0.0
        %1118 = vmatprep.mubr.f32.mxu0 0.0
        %1119 = vmatmul.mubr.f32.gmra.mrb[0].mxu0 %v866
        %v1120 = vpop.f32.mrb[0].mxu0
        %v1121 = vadd.f32 %v1044, %v1120
        %v1122 = vpop.f32.mrb[0].mxu0
        %v1123 = vadd.f32 %v1046, %v1122
        %1124 = vmatprep.mubr.f32.mxu0 0.0
        %1125 = vmatmul.mubr.f32.gmra.mrb[0].mxu0 %v865
        %v1126 = vpop.f32.mrb[0].mxu0
        %v1127 = vadd.f32 %v1050, %v1126
        %v1128 = vpop.f32.mrb[0].mxu0
        %v1129 = vadd.f32 %v1052, %v1128
        %1130 = vdwg.mxu0
        %v1135 = vrot.slane %v1121, 1
        %v1136 = vrot.slane %v1127, 1
        %v1137 = vsel %vm419, %v1135, %v1136
        %v1138 = vrot.slane %v1123, 1
        %v1139 = vrot.slane %v1129, 1
        %v1140 = vsel %vm419, %v1138, %v1139
        %v1143 = vrot.slane %v1121, 2
        %v1144 = vrot.slane %v1127, 2
        %v1145 = vsel %vm425, %v1143, %v1144
        %v1146 = vrot.slane %v1123, 2
        %v1147 = vrot.slane %v1129, 2
        %v1148 = vsel %vm425, %v1146, %v1147
        %v1151 = vld [vmem:[#allocation6] sm:$0xff]
        %v1152 = vld [vmem:[#allocation6 + $0x8] sm:$0xff]
        %v1153 = vld [vmem:[#allocation6 + $0x10] sm:$0xff]
        %v1154 = vld [vmem:[#allocation6 + $0x18] sm:$0xff]
        %v1155 = vld [vmem:[#allocation6 + $0x20] sm:$0xff]
        %v1156 = vld [vmem:[#allocation6 + $0x28] sm:$0xff]
        %v1157 = vld [vmem:[#allocation6 + $0x30] sm:$0xff]
        %v1158 = vld [vmem:[#allocation6 + $0x38] sm:$0xff]
        %v1159 = vld [vmem:[#allocation6 + $0x40] sm:$0xff]
        %v1160 = vld [vmem:[#allocation6 + $0x48] sm:$0xff]
        %v1161 = vld [vmem:[#allocation6 + $0x50] sm:$0xff]
        %v1162 = vld [vmem:[#allocation6 + $0x58] sm:$0xff]
        %v1163 = vld [vmem:[#allocation6 + $0x60] sm:$0xff]
        %v1164 = vld [vmem:[#allocation6 + $0x68] sm:$0xff]
        %v1165 = vld [vmem:[#allocation6 + $0x70] sm:$0xff]
        %v1166 = vld [vmem:[#allocation6 + $0x78] sm:$0xff]
        %v1167 = vld [vmem:[#allocation6 + $0x80] sm:$0xff]
        %v1168 = vld [vmem:[#allocation6 + $0x88] sm:$0xff]
        %v1169 = vld [vmem:[#allocation6 + $0x90] sm:$0xff]
        %v1170 = vld [vmem:[#allocation6 + $0x98] sm:$0xff]
        %v1171 = vld [vmem:[#allocation6 + $0xa0] sm:$0xff]
        %v1172 = vld [vmem:[#allocation6 + $0xa8] sm:$0xff]
        %v1173 = vld [vmem:[#allocation6 + $0xb0] sm:$0xff]
        %v1174 = vld [vmem:[#allocation6 + $0xb8] sm:$0xff]
        %v1175 = vld [vmem:[#allocation6 + $0xc0] sm:$0xff]
        %v1176 = vld [vmem:[#allocation6 + $0xc8] sm:$0xff]
        %v1177 = vld [vmem:[#allocation6 + $0xd0] sm:$0xff]
        %v1178 = vld [vmem:[#allocation6 + $0xd8] sm:$0xff]
        %v1179 = vld [vmem:[#allocation6 + $0xe0] sm:$0xff]
        %v1180 = vld [vmem:[#allocation6 + $0xe8] sm:$0xff]
        %v1181 = vld [vmem:[#allocation6 + $0xf0] sm:$0xff]
        %v1182 = vld [vmem:[#allocation6 + $0xf8] sm:$0xff]
        %v1183 = vld [vmem:[#allocation6 + $0x100] sm:$0xff]
        %v1184 = vld [vmem:[#allocation6 + $0x108] sm:$0xff]
        %v1185 = vld [vmem:[#allocation6 + $0x110] sm:$0xff]
        %v1186 = vld [vmem:[#allocation6 + $0x118] sm:$0xff]
        %v1187 = vld [vmem:[#allocation6 + $0x120] sm:$0xff]
        %v1188 = vld [vmem:[#allocation6 + $0x128] sm:$0xff]
        %v1189 = vld [vmem:[#allocation6 + $0x130] sm:$0xff]
        %v1190 = vld [vmem:[#allocation6 + $0x138] sm:$0xff]
        %v1191 = vld [vmem:[#allocation6 + $0x140] sm:$0xff]
        %v1192 = vld [vmem:[#allocation6 + $0x148] sm:$0xff]
        %v1193 = vld [vmem:[#allocation6 + $0x150] sm:$0xff]
        %v1194 = vld [vmem:[#allocation6 + $0x158] sm:$0xff]
        %v1195 = vld [vmem:[#allocation6 + $0x160] sm:$0xff]
        %v1196 = vld [vmem:[#allocation6 + $0x168] sm:$0xff]
        %v1197 = vld [vmem:[#allocation6 + $0x170] sm:$0xff]
        %v1198 = vld [vmem:[#allocation6 + $0x178] sm:$0xff]
        %v1199 = vld [vmem:[#allocation6 + $0x180] sm:$0xff]
        %v1200 = vld [vmem:[#allocation6 + $0x188] sm:$0xff]
        %v1201 = vld [vmem:[#allocation6 + $0x190] sm:$0xff]
        %v1202 = vld [vmem:[#allocation6 + $0x198] sm:$0xff]
        %v1203 = vld [vmem:[#allocation6 + $0x1a0] sm:$0xff]
        %v1204 = vld [vmem:[#allocation6 + $0x1a8] sm:$0xff]
        %v1205 = vld [vmem:[#allocation6 + $0x1b0] sm:$0xff]
        %v1206 = vld [vmem:[#allocation6 + $0x1b8] sm:$0xff]
        %v1207 = vld [vmem:[#allocation6 + $0x1c0] sm:$0xff]
        %v1208 = vld [vmem:[#allocation6 + $0x1c8] sm:$0xff]
        %v1209 = vld [vmem:[#allocation6 + $0x1d0] sm:$0xff]
        %v1210 = vld [vmem:[#allocation6 + $0x1d8] sm:$0xff]
        %v1211 = vld [vmem:[#allocation6 + $0x1e0] sm:$0xff]
        %v1212 = vld [vmem:[#allocation6 + $0x1e8] sm:$0xff]
        %v1213 = vld [vmem:[#allocation6 + $0x1f0] sm:$0xff]
        %v1214 = vld [vmem:[#allocation6 + $0x1f8] sm:$0xff]
        %v1215 = vld [vmem:[#allocation6 + $0x200] sm:$0xff]
        %v1216 = vld [vmem:[#allocation6 + $0x208] sm:$0xff]
        %v1217 = vld [vmem:[#allocation6 + $0x210] sm:$0xff]
        %v1218 = vld [vmem:[#allocation6 + $0x218] sm:$0xff]
        %v1219 = vld [vmem:[#allocation6 + $0x220] sm:$0xff]
        %v1220 = vld [vmem:[#allocation6 + $0x228] sm:$0xff]
        %v1221 = vld [vmem:[#allocation6 + $0x230] sm:$0xff]
        %v1222 = vld [vmem:[#allocation6 + $0x238] sm:$0xff]
        %v1223 = vld [vmem:[#allocation6 + $0x240] sm:$0xff]
        %v1224 = vld [vmem:[#allocation6 + $0x248] sm:$0xff]
        %v1225 = vld [vmem:[#allocation6 + $0x250] sm:$0xff]
        %v1226 = vld [vmem:[#allocation6 + $0x258] sm:$0xff]
        %v1227 = vld [vmem:[#allocation6 + $0x260] sm:$0xff]
        %v1228 = vld [vmem:[#allocation6 + $0x268] sm:$0xff]
        %v1229 = vld [vmem:[#allocation6 + $0x270] sm:$0xff]
        %v1230 = vld [vmem:[#allocation6 + $0x278] sm:$0xff]
        %v1231 = vld [vmem:[#allocation6 + $0x280] sm:$0xff]
        %v1232 = vld [vmem:[#allocation6 + $0x288] sm:$0xff]
        %v1233 = vld [vmem:[#allocation6 + $0x290] sm:$0xff]
        %v1234 = vld [vmem:[#allocation6 + $0x298] sm:$0xff]
        %v1235 = vld [vmem:[#allocation6 + $0x2a0] sm:$0xff]
        %v1236 = vld [vmem:[#allocation6 + $0x2a8] sm:$0xff]
        %v1237 = vld [vmem:[#allocation6 + $0x2b0] sm:$0xff]
        %v1238 = vld [vmem:[#allocation6 + $0x2b8] sm:$0xff]
        %v1239 = vld [vmem:[#allocation6 + $0x2c0] sm:$0xff]
        %v1240 = vld [vmem:[#allocation6 + $0x2c8] sm:$0xff]
        %v1241 = vld [vmem:[#allocation6 + $0x2d0] sm:$0xff]
        %v1242 = vld [vmem:[#allocation6 + $0x2d8] sm:$0xff]
        %v1243 = vld [vmem:[#allocation6 + $0x2e0] sm:$0xff]
        %v1244 = vld [vmem:[#allocation6 + $0x2e8] sm:$0xff]
        %v1245 = vld [vmem:[#allocation6 + $0x2f0] sm:$0xff]
        %v1246 = vld [vmem:[#allocation6 + $0x2f8] sm:$0xff]
        %v1247 = vld [vmem:[%s8] sm:$0x1]
        %v1249 = vlaneseq
        %v1250 = vshrl.u32 %v1249, 7
        %v1251 = vsub.s32 0, %v1250
        %v1252 = vrot.slane %v1247, %v1251
        %1254 = vmatprep.subr.mxu0 0.0
        %1255 = vmatpush1.msra.mxu0 %v1151
        %1256 = vmatprep.subr.mxu0 0.0
        %1257 = vmatpush1.msra.mxu0 %v1152
        %1258 = vmatprep.subr.mxu0 0.0
        %1259 = vmatpush1.msra.mxu0 %v1153
        %1260 = vmatprep.subr.mxu0 0.0
        %1261 = vmatpush1.msra.mxu0 %v1154
        %1262 = vmatprep.subr.mxu0 0.0
        %1263 = vmatpush1.msra.mxu0 %v1155
        %1264 = vmatprep.subr.mxu0 0.0
        %1265 = vmatpush1.msra.mxu0 %v1156
        %1266 = vmatprep.subr.mxu0 0.0
        %1267 = vmatpush1.msra.mxu0 %v1157
        %1268 = vmatprep.subr.mxu0 0.0
        %1269 = vmatpush1.msra.mxu0 %v1158
        %1270 = vmatprep.subr.mxu0 0.0
        %1271 = vmatpush1.msra.mxu0 %v1159
        %1272 = vmatprep.subr.mxu0 0.0
        %1273 = vmatpush1.msra.mxu0 %v1160
        %1274 = vmatprep.subr.mxu0 0.0
        %1275 = vmatpush1.msra.mxu0 %v1161
        %1276 = vmatprep.subr.mxu0 0.0
        %1277 = vmatpush1.msra.mxu0 %v1162
        %1278 = vmatprep.subr.mxu0 0.0
        %1279 = vmatpush1.msra.mxu0 %v1163
        %1280 = vmatprep.subr.mxu0 0.0
        %1281 = vmatpush1.msra.mxu0 %v1164
        %1282 = vmatprep.subr.mxu0 0.0
        %1283 = vmatpush1.msra.mxu0 %v1165
        %1284 = vmatprep.subr.mxu0 0.0
        %1285 = vmatpush1.msra.mxu0 %v1166
        %1286 = vmatprep.subr.mxu0 0.0
        %1287 = vmatpush1.msra.mxu0 %v1167
        %1288 = vmatprep.subr.mxu0 0.0
        %1289 = vmatpush1.msra.mxu0 %v1168
        %1290 = vmatprep.subr.mxu0 0.0
        %1291 = vmatpush1.msra.mxu0 %v1169
        %1292 = vmatprep.subr.mxu0 0.0
        %1293 = vmatpush1.msra.mxu0 %v1170
        %1294 = vmatprep.subr.mxu0 0.0
        %1295 = vmatpush1.msra.mxu0 %v1171
        %1296 = vmatprep.subr.mxu0 0.0
        %1297 = vmatpush1.msra.mxu0 %v1172
        %1298 = vmatprep.subr.mxu0 0.0
        %1299 = vmatpush1.msra.mxu0 %v1173
        %1300 = vmatprep.subr.mxu0 0.0
        %1301 = vmatpush1.msra.mxu0 %v1174
        %1302 = vmatprep.subr.mxu0 0.0
        %1303 = vmatpush1.msra.mxu0 %v1175
        %1304 = vmatprep.subr.mxu0 0.0
        %1305 = vmatpush1.msra.mxu0 %v1176
        %1306 = vmatprep.subr.mxu0 0.0
        %1307 = vmatpush1.msra.mxu0 %v1177
        %1308 = vmatprep.subr.mxu0 0.0
        %1309 = vmatpush1.msra.mxu0 %v1178
        %1310 = vmatprep.subr.mxu0 0.0
        %1311 = vmatpush1.msra.mxu0 %v1179
        %1312 = vmatprep.subr.mxu0 0.0
        %1313 = vmatpush1.msra.mxu0 %v1180
        %1314 = vmatprep.subr.mxu0 0.0
        %1315 = vmatpush1.msra.mxu0 %v1181
        %1316 = vmatprep.subr.mxu0 0.0
        %1317 = vmatpush1.msra.mxu0 %v1182
        %1318 = vmatprep.mubr.f32.mxu0 %v1123
        %1319 = vmatmul.mubr.f32.gmra.mrb[0].mxu0 %v1121
        %v1320 = vpop.f32.mrb[0].mxu0
        %v1321 = vadd.f32 %v1252, %v1320
        %v1322 = vpop.f32.mrb[0].mxu0
        %1323 = vdwg.mxu0
        %1324 = vmatprep.subr.mxu0 0.0
        %1325 = vmatpush1.msra.mxu0 %v1183
        %1326 = vmatprep.subr.mxu0 0.0
        %1327 = vmatpush1.msra.mxu0 %v1184
        %1328 = vmatprep.subr.mxu0 0.0
        %1329 = vmatpush1.msra.mxu0 %v1185
        %1330 = vmatprep.subr.mxu0 0.0
        %1331 = vmatpush1.msra.mxu0 %v1186
        %1332 = vmatprep.subr.mxu0 0.0
        %1333 = vmatpush1.msra.mxu0 %v1187
        %1334 = vmatprep.subr.mxu0 0.0
        %1335 = vmatpush1.msra.mxu0 %v1188
        %1336 = vmatprep.subr.mxu0 0.0
        %1337 = vmatpush1.msra.mxu0 %v1189
        %1338 = vmatprep.subr.mxu0 0.0
        %1339 = vmatpush1.msra.mxu0 %v1190
        %1340 = vmatprep.subr.mxu0 0.0
        %1341 = vmatpush1.msra.mxu0 %v1191
        %1342 = vmatprep.subr.mxu0 0.0
        %1343 = vmatpush1.msra.mxu0 %v1192
        %1344 = vmatprep.subr.mxu0 0.0
        %1345 = vmatpush1.msra.mxu0 %v1193
        %1346 = vmatprep.subr.mxu0 0.0
        %1347 = vmatpush1.msra.mxu0 %v1194
        %1348 = vmatprep.subr.mxu0 0.0
        %1349 = vmatpush1.msra.mxu0 %v1195
        %1350 = vmatprep.subr.mxu0 0.0
        %1351 = vmatpush1.msra.mxu0 %v1196
        %1352 = vmatprep.subr.mxu0 0.0
        %1353 = vmatpush1.msra.mxu0 %v1197
        %1354 = vmatprep.subr.mxu0 0.0
        %1355 = vmatpush1.msra.mxu0 %v1198
        %1356 = vmatprep.subr.mxu0 0.0
        %1357 = vmatpush1.msra.mxu0 %v1199
        %1358 = vmatprep.subr.mxu0 0.0
        %1359 = vmatpush1.msra.mxu0 %v1200
        %1360 = vmatprep.subr.mxu0 0.0
        %1361 = vmatpush1.msra.mxu0 %v1201
        %1362 = vmatprep.subr.mxu0 0.0
        %1363 = vmatpush1.msra.mxu0 %v1202
        %1364 = vmatprep.subr.mxu0 0.0
        %1365 = vmatpush1.msra.mxu0 %v1203
        %1366 = vmatprep.subr.mxu0 0.0
        %1367 = vmatpush1.msra.mxu0 %v1204
        %1368 = vmatprep.subr.mxu0 0.0
        %1369 = vmatpush1.msra.mxu0 %v1205
        %1370 = vmatprep.subr.mxu0 0.0
        %1371 = vmatpush1.msra.mxu0 %v1206
        %1372 = vmatprep.subr.mxu0 0.0
        %1373 = vmatpush1.msra.mxu0 %v1207
        %1374 = vmatprep.subr.mxu0 0.0
        %1375 = vmatpush1.msra.mxu0 %v1208
        %1376 = vmatprep.subr.mxu0 0.0
        %1377 = vmatpush1.msra.mxu0 %v1209
        %1378 = vmatprep.subr.mxu0 0.0
        %1379 = vmatpush1.msra.mxu0 %v1210
        %1380 = vmatprep.subr.mxu0 0.0
        %1381 = vmatpush1.msra.mxu0 %v1211
        %1382 = vmatprep.subr.mxu0 0.0
        %1383 = vmatpush1.msra.mxu0 %v1212
        %1384 = vmatprep.subr.mxu0 0.0
        %1385 = vmatpush1.msra.mxu0 %v1213
        %1386 = vmatprep.subr.mxu0 0.0
        %1387 = vmatpush1.msra.mxu0 %v1214
        %1388 = vmatprep.mubr.f32.mxu0 %v1140
        %1389 = vmatmul.mubr.f32.gmra.mrb[0].mxu0 %v1137
        %v1390 = vpop.f32.mrb[0].mxu0
        %v1391 = vadd.f32 %v1321, %v1390
        %v1392 = vpop.f32.mrb[0].mxu0
        %1393 = vdwg.mxu0
        %1394 = vmatprep.subr.mxu0 0.0
        %1395 = vmatpush1.msra.mxu0 %v1215
        %1396 = vmatprep.subr.mxu0 0.0
        %1397 = vmatpush1.msra.mxu0 %v1216
        %1398 = vmatprep.subr.mxu0 0.0
        %1399 = vmatpush1.msra.mxu0 %v1217
        %1400 = vmatprep.subr.mxu0 0.0
        %1401 = vmatpush1.msra.mxu0 %v1218
        %1402 = vmatprep.subr.mxu0 0.0
        %1403 = vmatpush1.msra.mxu0 %v1219
        %1404 = vmatprep.subr.mxu0 0.0
        %1405 = vmatpush1.msra.mxu0 %v1220
        %1406 = vmatprep.subr.mxu0 0.0
        %1407 = vmatpush1.msra.mxu0 %v1221
        %1408 = vmatprep.subr.mxu0 0.0
        %1409 = vmatpush1.msra.mxu0 %v1222
        %1410 = vmatprep.subr.mxu0 0.0
        %1411 = vmatpush1.msra.mxu0 %v1223
        %1412 = vmatprep.subr.mxu0 0.0
        %1413 = vmatpush1.msra.mxu0 %v1224
        %1414 = vmatprep.subr.mxu0 0.0
        %1415 = vmatpush1.msra.mxu0 %v1225
        %1416 = vmatprep.subr.mxu0 0.0
        %1417 = vmatpush1.msra.mxu0 %v1226
        %1418 = vmatprep.subr.mxu0 0.0
        %1419 = vmatpush1.msra.mxu0 %v1227
        %1420 = vmatprep.subr.mxu0 0.0
        %1421 = vmatpush1.msra.mxu0 %v1228
        %1422 = vmatprep.subr.mxu0 0.0
        %1423 = vmatpush1.msra.mxu0 %v1229
        %1424 = vmatprep.subr.mxu0 0.0
        %1425 = vmatpush1.msra.mxu0 %v1230
        %1426 = vmatprep.subr.mxu0 0.0
        %1427 = vmatpush1.msra.mxu0 %v1231
        %1428 = vmatprep.subr.mxu0 0.0
        %1429 = vmatpush1.msra.mxu0 %v1232
        %1430 = vmatprep.subr.mxu0 0.0
        %1431 = vmatpush1.msra.mxu0 %v1233
        %1432 = vmatprep.subr.mxu0 0.0
        %1433 = vmatpush1.msra.mxu0 %v1234
        %1434 = vmatprep.subr.mxu0 0.0
        %1435 = vmatpush1.msra.mxu0 %v1235
        %1436 = vmatprep.subr.mxu0 0.0
        %1437 = vmatpush1.msra.mxu0 %v1236
        %1438 = vmatprep.subr.mxu0 0.0
        %1439 = vmatpush1.msra.mxu0 %v1237
        %1440 = vmatprep.subr.mxu0 0.0
        %1441 = vmatpush1.msra.mxu0 %v1238
        %1442 = vmatprep.subr.mxu0 0.0
        %1443 = vmatpush1.msra.mxu0 %v1239
        %1444 = vmatprep.subr.mxu0 0.0
        %1445 = vmatpush1.msra.mxu0 %v1240
        %1446 = vmatprep.subr.mxu0 0.0
        %1447 = vmatpush1.msra.mxu0 %v1241
        %1448 = vmatprep.subr.mxu0 0.0
        %1449 = vmatpush1.msra.mxu0 %v1242
        %1450 = vmatprep.subr.mxu0 0.0
        %1451 = vmatpush1.msra.mxu0 %v1243
        %1452 = vmatprep.subr.mxu0 0.0
        %1453 = vmatpush1.msra.mxu0 %v1244
        %1454 = vmatprep.subr.mxu0 0.0
        %1455 = vmatpush1.msra.mxu0 %v1245
        %1456 = vmatprep.subr.mxu0 0.0
        %1457 = vmatpush1.msra.mxu0 %v1246
        %1458 = vmatprep.mubr.f32.mxu0 %v1148
        %1459 = vmatmul.mubr.f32.gmra.mrb[0].mxu0 %v1145
        %v1460 = vpop.f32.mrb[0].mxu0
        %v1461 = vadd.f32 %v1391, %v1460
        %v1462 = vpop.f32.mrb[0].mxu0
        %1463 = vdwg.mxu0
        %v1464 = vmax.f32 %v1461, 0.0
        %1465 = vst [vmem:[%s414] sm:$0xff] %v1464
        %p1466 = scmp.lt.s32.totalorder %s24, 1
        %s1467 = scalar_select %p1466, %s24, 1
        %s1468 = smul.addr %s1467, 2
        %s1469 = smul.addr %s1468, 8
        %s1470 = scalar_lea.vmem %s9, %s1469
        %p1471 = scmp.lt.s32.totalorder %s24, 1
        %s1472 = scalar_select %p1471, %s24, 1
        %s1473 = smul.addr %s1472, 8
        %s1474 = scalar_lea.vmem %s10, %s1473
        // Predicated region
        $region69: #{forward.1} parent=55 // pred_check
          %p1475 = pneg %p236
        $region70: #{forward.1} parent=55 // pred_check_branch
          %1477 = sbr.rel (%p1475) target = $region72
        $region71: #{forward.1} parent=55 // pred_region
          _
        $region72: #{forward.1} parent=55 // pred_fallthru
          _
        // Predicated region
        $region73: #{forward.1} parent=55 // pred_check
          %p1478 = pneg %p262
        $region74: #{forward.1} parent=55 // pred_check_branch
          %1480 = sbr.rel (%p1478) target = $region76
        $region75: #{forward.1} parent=55 // pred_region
          _
        $region76: #{forward.1} parent=55 // pred_fallthru
          _
      $region56: #{forward.1} parent=5 // pred_fallthru
        _
      %p1481 = scmp.le.s32.totalorder 2, %s19
      // Predicated region
      $region77: #{forward.1} parent=5 // pred_check
        %p1482 = pneg %p1481
      $region78: #{forward.1} parent=5 // pred_check_branch
        %1484 = sbr.rel (%p1482) target = $region80
      $region79: #{forward.1} parent=5 // pred_region
        %s1485 = ssub.s32 %s19, 2
        // Predicated region
        $region81: #{forward.1} parent=79 // pred_check
          %p1486 = pneg %p242
        $region82: #{forward.1} parent=79 // pred_check_branch
          %1488 = sbr.rel (%p1486) target = $region84
        $region83: #{forward.1} parent=79 // pred_region
          %p1489 = scmp.lt.s32.totalorder %s25, 1
          %s1490 = scalar_select %p1489, %s25, 1
          %s1491 = smul.addr %s1490, 2
          %s1492 = smul.addr %s1491, 8
          %s1493 = scalar_lea.vmem %s9, %s1492
        $region84: #{forward.1} parent=79 // pred_fallthru
          _
        // Predicated region
        $region85: #{forward.1} parent=79 // pred_check
          %p1494 = pneg %p268
        $region86: #{forward.1} parent=79 // pred_check_branch
          %1496 = sbr.rel (%p1494) target = $region88
        $region87: #{forward.1} parent=79 // pred_region
          %p1497 = scmp.lt.s32.totalorder %s25, 1
          %s1498 = scalar_select %p1497, %s25, 1
          %s1499 = smul.addr %s1498, 8
          %s1500 = scalar_lea.vmem %s10, %s1499
        $region88: #{forward.1} parent=79 // pred_fallthru
          _
      $region80: #{forward.1} parent=5 // pred_fallthru
        _
    $region6: #{forward.1} parent=1 // loop_footer
      %s23 = sadd.s32 1, %s19
    $region7: #{forward.1} parent=1 // loop_footer_branch
      %18 = sbr.rel target = $region3
    $region8: #{forward.1} parent=1 // loop_exit
      _
    %1501 = vsyncpa [#allocation3], 1
    %s1502 = scalar_lea.sflag [#allocation3], 1
    %1503 = vsyncpa %s1502, 1
    %1504 = vsyncpa [#allocation5], 1

</llo_original>
